<compile_context>
chip_gen: v6e
topology: v6e:2x2x1
jax: 0.10.0
libtpu: 0.0.40
codegen_flags: <defaults>
</compile_context>

<pallas_src>
import functools

import jax
import jax.numpy as jnp
from jax import lax
from jax.experimental import pallas as pl
from jax.experimental.pallas import tpu as pltpu

_NEG_INF = -1e30   # finite "minus infinity" so exp(a - b) never sees inf - inf
_LANES = 128


def _round_up(x, m):
    return (x + m - 1) // m * m


def _supcon_kernel(*refs, inv_temp, n_contrast, block_m, block_c,
                   has_mask, has_col_pad):
    if has_mask:
        (mask_ref, a_ref, c_ref, lse_ref, spos_ref,
         a_scl_ref, m_ref, l_ref, s_ref) = refs
    else:
        (row_tag_ref, col_tag_ref, a_ref, c_ref, lse_ref, spos_ref,
         a_scl_ref, m_ref, l_ref, s_ref) = refs

    i = pl.program_id(0)          # anchor row tile (parallel)
    j = pl.program_id(1)          # contrast column tile (reduction axis)

    @pl.when(j == 0)
    def _init():
        # Fold 1/T into the anchor tile ONCE per row tile (not per column
        # step); keep the native dtype so bf16 features stay bf16 for the MXU.
        a_scl_ref[...] = a_ref[...] * inv_temp
        m_ref[...] = jnp.full_like(m_ref, _NEG_INF)
        l_ref[...] = jnp.zeros_like(l_ref)
        s_ref[...] = jnp.zeros_like(s_ref)

    z = lax.dot_general(a_scl_ref[...], c_ref[...], (((1,), (1,)), ((), ())),
                        preferred_element_type=jnp.float32)       # [TM, TC]

    # Online log-sum-exp over raw z.  Padded columns have z == 0; including 0
    # in the running max is just a safe finite shift (finalize is exact for
    # any finite shift), so no col_valid select is needed here.
    m_prev = m_ref[...]                                           # [TM, 128]
    m_curr = jnp.max(z, axis=1, keepdims=True)                    # [TM, 1]
    m_next = jnp.maximum(m_prev, m_curr)                          # [TM, 128]
    alpha = jnp.exp(m_prev - m_next)                              # [TM, 128]
    ez = jnp.exp(z - jnp.tile(m_next, (1, block_c // _LANES)))    # [TM, TC]
    l_corr = alpha * l_ref[...]
    s_prev = s_ref[...]

    # Positive-pair weighted logits on raw (unshifted) z; the shift cancels
    # exactly at finalize, so S never needs rescaling.
    if has_mask:
        pos_z = mask_ref[...] * z
    else:
        pos_z = jnp.where(row_tag_ref[...] == col_tag_ref[...], z, 0.0)

    # Only tiles intersecting the self-diagonal or the padded columns need the
    # logits_mask; every other tile takes the mask-free fast path.
    needs_diag = jnp.logical_and(i * block_m < (j + 1) * block_c,
                                 j * block_c < (i + 1) * block_m)
    if has_col_pad:
        needs_mask = jnp.logical_or(needs_diag, j == pl.num_programs(1) - 1)
    else:
        needs_mask = needs_diag

    @pl.when(needs_mask)
    def _edge_tile():
        row_g = i * block_m + lax.broadcasted_iota(
            jnp.int32, (block_m, block_c), 0)
        col_g = j * block_c + lax.broadcasted_iota(
            jnp.int32, (block_m, block_c), 1)
        contrast = jnp.logical_and(col_g < n_contrast, row_g != col_g)
        l_ref[...] = l_corr + jnp.sum(jnp.where(contrast, ez, 0.0),
                                      axis=1, keepdims=True)
        s_ref[...] = s_prev + jnp.sum(jnp.where(contrast, pos_z, 0.0),
                                      axis=1, keepdims=True)

    @pl.when(jnp.logical_not(needs_mask))
    def _interior_tile():
        l_ref[...] = l_corr + jnp.sum(ez, axis=1, keepdims=True)
        s_ref[...] = s_prev + jnp.sum(pos_z, axis=1, keepdims=True)

    m_ref[...] = m_next

    @pl.when(j == pl.num_programs(1) - 1)
    def _finalize():
        lse = m_next + jnp.log(l_ref[...])        # [TM, 128] lane-replicated
        lse_ref[...] = lse[:, :1]
        spos_ref[...] = s_ref[...][:, :1]


def _select_blocks(n_anchor, n_contrast, d_pad, feat_bytes, has_mask,
                   block_m, block_c):
    kind = ""
    try:
        kind = jax.devices()[0].device_kind.lower()
    except Exception:
        pass
    is_v5e = ("v5 lite" in kind) or ("v5e" in kind) or ("v5lite" in kind)
    base = 128 if is_v5e else 256

    bc = block_c if block_c is not None else base
    # Larger row tiles cut HBM re-streaming of the contrast features when the
    # kernel goes bandwidth-bound at large D (traffic ~ N * D * a_pad / bm).
    bm = block_m if block_m is not None else (
        512 if (d_pad >= 2048 and not is_v5e) else base)

    bc = _round_up(max(128, int(bc)), 128)
    bm = _round_up(max(128, int(bm)), 128)
    bc = min(bc, _round_up(n_contrast, 128))
    bm = min(bm, _round_up(n_anchor, 128))

    # v7x megacore: the "parallel" row axis only shards across 2 TensorCores
    # if there are >= 2 row tiles.
    while bm > 128 and pl.cdiv(n_anchor, bm) < 2:
        bm = max(128, _round_up(bm // 2, 128))

    def vmem_need(bm_, bc_):
        need = 2 * (bm_ + bc_) * d_pad * feat_bytes    # double-buffered feature tiles
        need += bm_ * d_pad * feat_bytes               # scaled-anchor scratch
        if has_mask:
            need += 2 * bm_ * bc_ * 4                  # double-buffered mask tile
        need += 3 * bm_ * _LANES * 4                   # m / l / S accumulators
        need += 6 * bm_ * bc_ * 4                      # z / exp / select temporaries
        return need

    # Keep the working set inside ~40 MiB so it also fits v7x (64 MiB VMEM).
    budget = 40 << 20
    while vmem_need(bm, bc) > budget and (bm > 128 or bc > 128):
        if bm >= bc and bm > 128:
            bm = max(128, _round_up(bm // 2, 128))
        elif bc > 128:
            bc = max(128, _round_up(bc // 2, 128))
        else:
            break

    est = vmem_need(bm, bc)
    vmem_limit = None
    if est > (24 << 20):
        vmem_limit = int(min(max(est + (8 << 20), 32 << 20), 50 << 20))
    return bm, bc, vmem_limit


def supcon_loss(features, labels=None, mask=None, *, temperature=0.07,
                contrast_mode="all", base_temperature=0.07,
                block_m=None, block_c=None):
    """JAX/Pallas equivalent of SupConLoss.forward.

    features: [bsz, n_views, ...]; labels: optional [bsz]; mask: optional
    [bsz, bsz].  block_m / block_c: optional tile overrides (multiples of 128).
    """
    if features.ndim < 3:
        raise ValueError("`features` needs to be [bsz, n_views, ...]")
    if features.ndim > 3:
        features = features.reshape(features.shape[0], features.shape[1], -1)
    if labels is not None and mask is not None:
        raise ValueError("Cannot define both `labels` and `mask`")

    bsz, n_views, d = features.shape
    n = bsz * n_views

    if contrast_mode == "one":
        n_anchor = bsz
        anchor_count = 1
    elif contrast_mode == "all":
        n_anchor = n
        anchor_count = n_views
    else:
        raise ValueError(f"Unknown mode: {contrast_mode}")

    # contrast_feature = cat(unbind(features, dim=1), dim=0) -> [N, D]
    # (view-major; rows [0, bsz) are view 0 == the 'one'-mode anchors, so both
    # modes read from the same padded feature buffer.)
    cf = jnp.transpose(features, (1, 0, 2)).reshape(n, d)

    has_mask = mask is not None
    d_pad = _round_up(d, 128)
    feat_bytes = jnp.dtype(cf.dtype).itemsize
    bm, bc, vmem_limit = _select_blocks(n_anchor, n, d_pad, feat_bytes,
                                        has_mask, block_m, block_c)

    a_pad = _round_up(n_anchor, bm)
    n_pad = _round_up(n, bc)
    rows_pad = max(a_pad, n_pad)          # one padded buffer serves both views
    cf_p = jnp.pad(cf, ((0, rows_pad - n), (0, d_pad - d)))   # native dtype

    inv_temp = 1.0 / float(temperature)
    loss_scale = -(float(temperature) / float(base_temperature))
    grid = (a_pad // bm, n_pad // bc)

    feat_row_spec = pl.BlockSpec((bm, d_pad), lambda i, j: (i, 0))
    feat_col_spec = pl.BlockSpec((bc, d_pad), lambda i, j: (j, 0))
    out_specs = [pl.BlockSpec((bm, 1), lambda i, j: (i, 0)),
                 pl.BlockSpec((bm, 1), lambda i, j: (i, 0))]
    out_shape = (jax.ShapeDtypeStruct((a_pad, 1), jnp.float32),   # m + log(l)
                 jax.ShapeDtypeStruct((a_pad, 1), jnp.float32))   # sum(mask*z)
    scratch = [pltpu.VMEM((bm, d_pad), cf_p.dtype),    # 1/T-scaled anchor tile
               pltpu.VMEM((bm, _LANES), jnp.float32),  # running max m
               pltpu.VMEM((bm, _LANES), jnp.float32),  # running sum exp(z - m)
               pltpu.VMEM((bm, _LANES), jnp.float32)]  # running sum(mask * z)

    base_idx = jnp.arange(n, dtype=jnp.int32) % bsz      # batch index per row
    anchor_base = base_idx[:n_anchor]

    if not has_mask:
        if labels is None:
            tags_batch = jnp.arange(bsz, dtype=jnp.int32)        # SimCLR / eye
        else:
            labels = jnp.asarray(labels).reshape(-1)
            if labels.shape[0] != bsz:
                raise ValueError("Num of labels does not match num of features")
            tags_batch = labels.astype(jnp.int32)
        tags = tags_batch[base_idx]                              # [n]
        # P = positives per anchor row (same tag, self excluded); O(bsz^2) in
        # the wrapper so the kernel never accumulates it.
        cnt = jnp.sum(tags_batch[:, None] == tags_batch[None, :],
                      axis=1).astype(jnp.float32)                # [bsz]
        p_anchor = n_views * cnt[anchor_base] - 1.0              # [n_anchor]

        row_tags = jnp.full((a_pad, 1), -1, jnp.int32).at[:n_anchor, 0].set(
            tags[:n_anchor])
        col_tags = jnp.full((1, n_pad), -2, jnp.int32).at[0, :n].set(tags)
        in_specs = [
            pl.BlockSpec((bm, 1), lambda i, j: (i, 0)),      # row tags
            pl.BlockSpec((1, bc), lambda i, j: (0, j)),      # col tags
            feat_row_spec, feat_col_spec,
        ]
        inputs = (row_tags, col_tags, cf_p, cf_p)
    else:
        base_mask = jnp.asarray(mask).astype(jnp.float32)        # [bsz, bsz]
        p_anchor = (n_views * jnp.sum(base_mask, axis=1)
                    - jnp.diagonal(base_mask))[anchor_base]      # [n_anchor]
        # TODO(synk): rarely-used fallback still materializes the tiled [N, N]
        # f32 mask in HBM; index-mapping the base [bsz, bsz] mask (when
        # bsz % block == 0) or shipping it as int8 would cut that traffic >=4x.
        mask_rep = jnp.tile(base_mask, (anchor_count, n_views))  # [n_anchor, n]
        mask_p = jnp.pad(mask_rep, ((0, a_pad - n_anchor), (0, n_pad - n)))
        in_specs = [
            pl.BlockSpec((bm, bc), lambda i, j: (i, j)),     # mask tile
            feat_row_spec, feat_col_spec,
        ]
        inputs = (mask_p, cf_p, cf_p)

    kernel = functools.partial(
        _supcon_kernel,
        inv_temp=inv_temp, n_contrast=n,
        block_m=bm, block_c=bc,
        has_mask=has_mask, has_col_pad=(n_pad != n))

    lse, s_pos = pl.pallas_call(
        kernel,
        out_shape=out_shape,
        grid_spec=pltpu.PrefetchScalarGridSpec(
            num_scalar_prefetch=0,
            grid=grid,
            in_specs=in_specs,
            out_specs=out_specs,
            scratch_shapes=scratch),
        compiler_params=pltpu.CompilerParams(
            dimension_semantics=("parallel", "arbitrary"),
            vmem_limit_bytes=vmem_limit),
    )(*inputs)

    lse = lse[:n_anchor, 0]
    s_pos = s_pos[:n_anchor, 0]

    # mean_log_prob_pos = S/P - logsumexp(non-self logits); exact division in
    # the wrapper (off the hot path).  Anchor rows with zero positives
    # (degenerate mask) contribute 0 here -- the PyTorch reference would NaN.
    valid = p_anchor > 0.0
    mean_lpp = s_pos / jnp.where(valid, p_anchor, 1.0) - lse
    per_row = jnp.where(valid, loss_scale * mean_lpp, 0.0)
    return jnp.sum(per_row) / n_anchor


def _supcon_loss_ref(features, labels=None, mask=None, *, temperature=0.07,
                     contrast_mode="all", base_temperature=0.07):
    """Pure-JAX reference mirroring the PyTorch forward."""
    bsz, n_views, d = features.shape
    if mask is None:
        if labels is None:
            mask = jnp.eye(bsz, dtype=jnp.float32)
        else:
            labels = jnp.asarray(labels).reshape(-1, 1)
            mask = (labels == labels.T).astype(jnp.float32)
    else:
        mask = jnp.asarray(mask).astype(jnp.float32)
    cf = jnp.transpose(features, (1, 0, 2)).reshape(n_views * bsz, d)
    cf = cf.astype(jnp.float32)
    if contrast_mode == "one":
        anchor, anchor_count = cf[:bsz], 1
    else:
        anchor, anchor_count = cf, n_views
    na = anchor_count * bsz
    logits = anchor @ cf.T / temperature
    logits = logits - jnp.max(logits, axis=1, keepdims=True)
    mask = jnp.tile(mask, (anchor_count, n_views))
    logits_mask = jnp.ones_like(mask).at[jnp.arange(na), jnp.arange(na)].set(0.0)
    mask = mask * logits_mask
    exp_logits = jnp.exp(logits) * logits_mask
    log_prob = logits - jnp.log(exp_logits.sum(1, keepdims=True))
    mean_log_prob_pos = (mask * log_prob).sum(1) / mask.sum(1)
    loss = -(temperature / base_temperature) * mean_log_prob_pos
    return loss.mean()


if __name__ == "__main__":
    key = jax.random.PRNGKey(0)
    bsz, n_views, feat_dim = 8, 2, 32
    kf, kl = jax.random.split(key)
    features = jax.random.normal(kf, (bsz, n_views, feat_dim), jnp.float32)
    features = features / jnp.linalg.norm(features, axis=-1, keepdims=True)
    labels = jax.random.randint(kl, (bsz,), 0, 3)
    label_mask = (labels.reshape(-1, 1) == labels.reshape(1, -1)).astype(jnp.float32)

    checks = [
        # SimCLR (no labels) path -- tags built from batch index.
        (supcon_loss(features), _supcon_loss_ref(features)),
        # Supervised path -- tags = labels, no N x N mask in HBM.
        (supcon_loss(features, labels=labels),
         _supcon_loss_ref(features, labels=labels)),
        # Explicit-mask fallback path (tiled mask input).
        (supcon_loss(features, mask=label_mask),
         _supcon_loss_ref(features, mask=label_mask)),
        # contrast_mode='one'.
        (supcon_loss(features, labels=labels, contrast_mode="one"),
         _supcon_loss_ref(features, labels=labels, contrast_mode="one")),
    ]

    # Multi-tile grid: exercises fast-path tiles, diagonal tiles and the
    # padded last-column tile (N=144 with 128-wide tiles).
    bsz2, nv2, d2 = 72, 2, 96
    k2, k3 = jax.random.split(kl)
    f2 = jax.random.normal(k2, (bsz2, nv2, d2), jnp.float32)
    f2 = f2 / jnp.linalg.norm(f2, axis=-1, keepdims=True)
    l2 = jax.random.randint(k3, (bsz2,), 0, 5)
    checks.append((supcon_loss(f2, labels=l2, block_m=128, block_c=128),
                   _supcon_loss_ref(f2, labels=l2)))

    for got, want in checks:
        got = jax.block_until_ready(got)
        assert jnp.allclose(got, want, rtol=5e-3, atol=5e-3), (got, want)

    print("KERNEL_OK")
</pallas_src>

<mosaic_0001>
module attributes {stable_mosaic.version = 11 : i64} {
  func.func @_supcon_kernel(%arg0: i32, %arg1: i32, %arg2: memref<128x1xi32, #tpu.memory_space<vmem>>, %arg3: memref<1x128xi32, #tpu.memory_space<vmem>>, %arg4: memref<128x128xf32, #tpu.memory_space<vmem>>, %arg5: memref<128x128xf32, #tpu.memory_space<vmem>>, %arg6: memref<128x1xf32, #tpu.memory_space<vmem>>, %arg7: memref<128x1xf32, #tpu.memory_space<vmem>>, %arg8: memref<128x128xf32, #tpu.memory_space<vmem>>, %arg9: memref<128x128xf32, #tpu.memory_space<vmem>>, %arg10: memref<128x128xf32, #tpu.memory_space<vmem>>, %arg11: memref<128x128xf32, #tpu.memory_space<vmem>>) attributes {dimension_semantics = [#tpu.dimension_semantics<parallel>, #tpu.dimension_semantics<arbitrary>], iteration_bounds = array<i64: 1, 1>, scalar_prefetch = 0 : i64, scratch_operands = 4 : i64, tpu.core_type = #tpu.core_type<tc>, window_params = [{transform_indices = @transform_0, window_bounds = array<i64: 128, 1>}, {transform_indices = @transform_1, window_bounds = array<i64: 1, 128>}, {transform_indices = @transform_2, window_bounds = array<i64: 128, 128>}, {transform_indices = @transform_3, window_bounds = array<i64: 128, 128>}, {transform_indices = @transform_4, window_bounds = array<i64: 128, 1>}, {transform_indices = @transform_5, window_bounds = array<i64: 128, 1>}]} {
    %c0_i32 = arith.constant 0 : i32
    %0 = arith.cmpi eq, %arg1, %c0_i32 : i32
    %1 = arith.extui %0 : i1 to i32
    %c0_i32_0 = arith.constant 0 : i32
    %2 = arith.cmpi ne, %1, %c0_i32_0 : i32
    scf.if %2 {
      %c0_27 = arith.constant 0 : index
      %c0_28 = arith.constant 0 : index
      %45 = vector.load %arg4[%c0_27, %c0_28] : memref<128x128xf32, #tpu.memory_space<vmem>>, vector<128x128xf32>
      %cst_29 = arith.constant 14.2857141 : f32
      %46 = vector.broadcast %cst_29 : f32 to vector<128x128xf32>
      %47 = arith.mulf %45, %46 : vector<128x128xf32>
      %c0_30 = arith.constant 0 : index
      %c0_31 = arith.constant 0 : index
      %48 = vector.load %arg8[%c0_30, %c0_31] : memref<128x128xf32, #tpu.memory_space<vmem>>, vector<128x128xf32>
      tpu.vector_store %arg8[%c0_30, %c0_31], %47 {strides = array<i32>} : memref<128x128xf32, #tpu.memory_space<vmem>>, vector<128x128xf32>,
      %cst_32 = arith.constant -1.000000e+30 : f32
      %49 = vector.broadcast %cst_32 : f32 to vector<128x128xf32>
      %c0_33 = arith.constant 0 : index
      %c0_34 = arith.constant 0 : index
      %50 = vector.load %arg9[%c0_33, %c0_34] : memref<128x128xf32, #tpu.memory_space<vmem>>, vector<128x128xf32>
      tpu.vector_store %arg9[%c0_33, %c0_34], %49 {strides = array<i32>} : memref<128x128xf32, #tpu.memory_space<vmem>>, vector<128x128xf32>,
      %cst_35 = arith.constant 0.000000e+00 : f32
      %51 = vector.broadcast %cst_35 : f32 to vector<128x128xf32>
      %c0_36 = arith.constant 0 : index
      %c0_37 = arith.constant 0 : index
      %52 = vector.load %arg10[%c0_36, %c0_37] : memref<128x128xf32, #tpu.memory_space<vmem>>, vector<128x128xf32>
      tpu.vector_store %arg10[%c0_36, %c0_37], %51 {strides = array<i32>} : memref<128x128xf32, #tpu.memory_space<vmem>>, vector<128x128xf32>,
      %cst_38 = arith.constant 0.000000e+00 : f32
      %53 = vector.broadcast %cst_38 : f32 to vector<128x128xf32>
      %c0_39 = arith.constant 0 : index
      %c0_40 = arith.constant 0 : index
      %54 = vector.load %arg11[%c0_39, %c0_40] : memref<128x128xf32, #tpu.memory_space<vmem>>, vector<128x128xf32>
      tpu.vector_store %arg11[%c0_39, %c0_40], %53 {strides = array<i32>} : memref<128x128xf32, #tpu.memory_space<vmem>>, vector<128x128xf32>,
    } else {
    }
    %c0 = arith.constant 0 : index
    %c0_1 = arith.constant 0 : index
    %3 = vector.load %arg8[%c0, %c0_1] : memref<128x128xf32, #tpu.memory_space<vmem>>, vector<128x128xf32>
    %c0_2 = arith.constant 0 : index
    %c0_3 = arith.constant 0 : index
    %4 = vector.load %arg5[%c0_2, %c0_3] : memref<128x128xf32, #tpu.memory_space<vmem>>, vector<128x128xf32>
    %cst = arith.constant dense<0.000000e+00> : vector<128x128xf32>
    %5 = tpu.matmul %3, %4, %cst {dimension_numbers = #tpu.dot_dimension_numbers<[1], [1], [0], [0], [0, 0, 1, 0], [], []>} : vector<128x128xf32>, vector<128x128xf32>, vector<128x128xf32> -> vector<128x128xf32>
    %c0_4 = arith.constant 0 : index
    %c0_5 = arith.constant 0 : index
    %6 = vector.load %arg9[%c0_4, %c0_5] : memref<128x128xf32, #tpu.memory_space<vmem>>, vector<128x128xf32>
    %cst_6 = arith.constant dense<0xFF800000> : vector<128xf32>
    %7 = vector.multi_reduction <maximumf>, %5, %cst_6 [1] : vector<128x128xf32> to vector<128xf32>
    %8 = vector.shape_cast %7 : vector<128xf32> to vector<128x1xf32>
    %9 = vector.broadcast %8 : vector<128x1xf32> to vector<128x128xf32>
    %10 = arith.maximumf %6, %9 : vector<128x128xf32>
    %11 = arith.subf %6, %10 : vector<128x128xf32>
    %12 = math.exp %11 : vector<128x128xf32>
    %13 = arith.subf %5, %10 : vector<128x128xf32>
    %14 = math.exp %13 : vector<128x128xf32>
    %c0_7 = arith.constant 0 : index
    %c0_8 = arith.constant 0 : index
    %15 = vector.load %arg10[%c0_7, %c0_8] : memref<128x128xf32, #tpu.memory_space<vmem>>, vector<128x128xf32>
    %16 = arith.mulf %12, %15 : vector<128x128xf32>
    %c0_9 = arith.constant 0 : index
    %c0_10 = arith.constant 0 : index
    %17 = vector.load %arg11[%c0_9, %c0_10] : memref<128x128xf32, #tpu.memory_space<vmem>>, vector<128x128xf32>
    %c0_11 = arith.constant 0 : index
    %c0_12 = arith.constant 0 : index
    %18 = vector.load %arg2[%c0_11, %c0_12] : memref<128x1xi32, #tpu.memory_space<vmem>>, vector<128x1xi32>
    %c0_13 = arith.constant 0 : index
    %c0_14 = arith.constant 0 : index
    %19 = vector.load %arg3[%c0_13, %c0_14] : memref<1x128xi32, #tpu.memory_space<vmem>>, vector<1x128xi32>
    %20 = vector.broadcast %18 : vector<128x1xi32> to vector<128x128xi32>
    %21 = vector.broadcast %19 : vector<1x128xi32> to vector<128x128xi32>
    %22 = arith.cmpi eq, %20, %21 : vector<128x128xi32>
    %cst_15 = arith.constant 0.000000e+00 : f32
    %23 = vector.broadcast %cst_15 : f32 to vector<128x128xf32>
    %24 = arith.select %22, %5, %23 : vector<128x128xi1>, vector<128x128xf32>
    %c128_i32 = arith.constant 128 : i32
    %25 = arith.muli %arg0, %c128_i32 : i32
    %c1_i32 = arith.constant 1 : i32
    %26 = arith.addi %arg1, %c1_i32 : i32
    %c128_i32_16 = arith.constant 128 : i32
    %27 = arith.muli %26, %c128_i32_16 : i32
    %28 = arith.cmpi slt, %25, %27 : i32
    %c128_i32_17 = arith.constant 128 : i32
    %29 = arith.muli %arg1, %c128_i32_17 : i32
    %c1_i32_18 = arith.constant 1 : i32
    %30 = arith.addi %arg0, %c1_i32_18 : i32
    %c128_i32_19 = arith.constant 128 : i32
    %31 = arith.muli %30, %c128_i32_19 : i32
    %32 = arith.cmpi slt, %29, %31 : i32
    %33 = arith.andi %28, %32 : i1
    %c0_i32_20 = arith.constant 0 : i32
    %34 = arith.cmpi eq, %arg1, %c0_i32_20 : i32
    %35 = arith.ori %33, %34 : i1
    %36 = arith.extui %35 : i1 to i32
    %c0_i32_21 = arith.constant 0 : i32
    %37 = arith.cmpi ne, %36, %c0_i32_21 : i32
    scf.if %37 {
      %c128_i32_27 = arith.constant 128 : i32
      %45 = arith.muli %arg0, %c128_i32_27 : i32
      %46 = tpu.iota {dimensions = array<i32: 0>} : vector<128x128xi32>
      %47 = vector.broadcast %45 : i32 to vector<128x128xi32>
      %48 = arith.addi %47, %46 : vector<128x128xi32>
      %c128_i32_28 = arith.constant 128 : i32
      %49 = arith.muli %arg1, %c128_i32_28 : i32
      %50 = tpu.iota {dimensions = array<i32: 1>} : vector<128x128xi32>
      %51 = vector.broadcast %49 : i32 to vector<128x128xi32>
      %52 = arith.addi %51, %50 : vector<128x128xi32>
      %c16_i32 = arith.constant 16 : i32
      %53 = vector.broadcast %c16_i32 : i32 to vector<128x128xi32>
      %54 = arith.cmpi slt, %52, %53 : vector<128x128xi32>
      %55 = arith.cmpi ne, %48, %52 : vector<128x128xi32>
      %56 = arith.andi %54, %55 : vector<128x128xi1>
      %cst_29 = arith.constant 0.000000e+00 : f32
      %57 = vector.broadcast %cst_29 : f32 to vector<128x128xf32>
      %58 = arith.select %56, %14, %57 : vector<128x128xi1>, vector<128x128xf32>
      %cst_30 = arith.constant dense<0.000000e+00> : vector<128xf32>
      %59 = vector.multi_reduction <add>, %58, %cst_30 [1] : vector<128x128xf32> to vector<128xf32>
      %60 = vector.shape_cast %59 : vector<128xf32> to vector<128x1xf32>
      %61 = vector.broadcast %60 : vector<128x1xf32> to vector<128x128xf32>
      %62 = arith.addf %16, %61 : vector<128x128xf32>
      %c0_31 = arith.constant 0 : index
      %c0_32 = arith.constant 0 : index
      %63 = vector.load %arg10[%c0_31, %c0_32] : memref<128x128xf32, #tpu.memory_space<vmem>>, vector<128x128xf32>
      tpu.vector_store %arg10[%c0_31, %c0_32], %62 {strides = array<i32>} : memref<128x128xf32, #tpu.memory_space<vmem>>, vector<128x128xf32>,
      %cst_33 = arith.constant 0.000000e+00 : f32
      %64 = vector.broadcast %cst_33 : f32 to vector<128x128xf32>
      %65 = arith.select %56, %24, %64 : vector<128x128xi1>, vector<128x128xf32>
      %cst_34 = arith.constant dense<0.000000e+00> : vector<128xf32>
      %66 = vector.multi_reduction <add>, %65, %cst_34 [1] : vector<128x128xf32> to vector<128xf32>
      %67 = vector.shape_cast %66 : vector<128xf32> to vector<128x1xf32>
      %68 = vector.broadcast %67 : vector<128x1xf32> to vector<128x128xf32>
      %69 = arith.addf %17, %68 : vector<128x128xf32>
      %c0_35 = arith.constant 0 : index
      %c0_36 = arith.constant 0 : index
      %70 = vector.load %arg11[%c0_35, %c0_36] : memref<128x128xf32, #tpu.memory_space<vmem>>, vector<128x128xf32>
      tpu.vector_store %arg11[%c0_35, %c0_36], %69 {strides = array<i32>} : memref<128x128xf32, #tpu.memory_space<vmem>>, vector<128x128xf32>,
    } else {
    }
    %true = arith.constant true
    %38 = arith.xori %35, %true : i1
    %39 = arith.extui %38 : i1 to i32
    %c0_i32_22 = arith.constant 0 : i32
    %40 = arith.cmpi ne, %39, %c0_i32_22 : i32
    scf.if %40 {
      %cst_27 = arith.constant dense<0.000000e+00> : vector<128xf32>
      %45 = vector.multi_reduction <add>, %14, %cst_27 [1] : vector<128x128xf32> to vector<128xf32>
      %46 = vector.shape_cast %45 : vector<128xf32> to vector<128x1xf32>
      %47 = vector.broadcast %46 : vector<128x1xf32> to vector<128x128xf32>
      %48 = arith.addf %16, %47 : vector<128x128xf32>
      %c0_28 = arith.constant 0 : index
      %c0_29 = arith.constant 0 : index
      %49 = vector.load %arg10[%c0_28, %c0_29] : memref<128x128xf32, #tpu.memory_space<vmem>>, vector<128x128xf32>
      tpu.vector_store %arg10[%c0_28, %c0_29], %48 {strides = array<i32>} : memref<128x128xf32, #tpu.memory_space<vmem>>, vector<128x128xf32>,
      %cst_30 = arith.constant dense<0.000000e+00> : vector<128xf32>
      %50 = vector.multi_reduction <add>, %24, %cst_30 [1] : vector<128x128xf32> to vector<128xf32>
      %51 = vector.shape_cast %50 : vector<128xf32> to vector<128x1xf32>
      %52 = vector.broadcast %51 : vector<128x1xf32> to vector<128x128xf32>
      %53 = arith.addf %17, %52 : vector<128x128xf32>
      %c0_31 = arith.constant 0 : index
      %c0_32 = arith.constant 0 : index
      %54 = vector.load %arg11[%c0_31, %c0_32] : memref<128x128xf32, #tpu.memory_space<vmem>>, vector<128x128xf32>
      tpu.vector_store %arg11[%c0_31, %c0_32], %53 {strides = array<i32>} : memref<128x128xf32, #tpu.memory_space<vmem>>, vector<128x128xf32>,
    } else {
    }
    %c0_23 = arith.constant 0 : index
    %c0_24 = arith.constant 0 : index
    %41 = vector.load %arg9[%c0_23, %c0_24] : memref<128x128xf32, #tpu.memory_space<vmem>>, vector<128x128xf32>
    tpu.vector_store %arg9[%c0_23, %c0_24], %10 {strides = array<i32>} : memref<128x128xf32, #tpu.memory_space<vmem>>, vector<128x128xf32>,
    %c0_i32_25 = arith.constant 0 : i32
    %42 = arith.cmpi eq, %arg1, %c0_i32_25 : i32
    %43 = arith.extui %42 : i1 to i32
    %c0_i32_26 = arith.constant 0 : i32
    %44 = arith.cmpi ne, %43, %c0_i32_26 : i32
    scf.if %44 {
      %c0_27 = arith.constant 0 : index
      %c0_28 = arith.constant 0 : index
      %45 = vector.load %arg10[%c0_27, %c0_28] : memref<128x128xf32, #tpu.memory_space<vmem>>, vector<128x128xf32>
      %46 = math.log %45 : vector<128x128xf32>
      %47 = arith.addf %10, %46 : vector<128x128xf32>
      %48 = vector.extract_strided_slice %47 {offsets = [0, 0], sizes = [128, 1], strides = [1, 1]} : vector<128x128xf32> to vector<128x1xf32>
      %c0_29 = arith.constant 0 : index
      %c0_30 = arith.constant 0 : index
      %49 = vector.load %arg6[%c0_29, %c0_30] : memref<128x1xf32, #tpu.memory_space<vmem>>, vector<128x1xf32>
      tpu.vector_store %arg6[%c0_29, %c0_30], %48 {strides = array<i32>} : memref<128x1xf32, #tpu.memory_space<vmem>>, vector<128x1xf32>,
      %c0_31 = arith.constant 0 : index
      %c0_32 = arith.constant 0 : index
      %50 = vector.load %arg11[%c0_31, %c0_32] : memref<128x128xf32, #tpu.memory_space<vmem>>, vector<128x128xf32>
      %51 = vector.extract_strided_slice %50 {offsets = [0, 0], sizes = [128, 1], strides = [1, 1]} : vector<128x128xf32> to vector<128x1xf32>
      %c0_33 = arith.constant 0 : index
      %c0_34 = arith.constant 0 : index
      %52 = vector.load %arg7[%c0_33, %c0_34] : memref<128x1xf32, #tpu.memory_space<vmem>>, vector<128x1xf32>
      tpu.vector_store %arg7[%c0_33, %c0_34], %51 {strides = array<i32>} : memref<128x1xf32, #tpu.memory_space<vmem>>, vector<128x1xf32>,
    } else {
    }
    return
  }
  func.func @transform_0(%arg0: i32, %arg1: i32) -> (i32, i32) {
    %c0_i32 = arith.constant 0 : i32
    %c0_i32_0 = arith.constant 0 : i32
    return %arg0, %c0_i32 : i32, i32
  }
  func.func @transform_1(%arg0: i32, %arg1: i32) -> (i32, i32) {
    %c0_i32 = arith.constant 0 : i32
    %c0_i32_0 = arith.constant 0 : i32
    return %c0_i32, %arg1 : i32, i32
  }
  func.func @transform_2(%arg0: i32, %arg1: i32) -> (i32, i32) {
    %c0_i32 = arith.constant 0 : i32
    %c0_i32_0 = arith.constant 0 : i32
    return %arg0, %c0_i32 : i32, i32
  }
  func.func @transform_3(%arg0: i32, %arg1: i32) -> (i32, i32) {
    %c0_i32 = arith.constant 0 : i32
    %c0_i32_0 = arith.constant 0 : i32
    return %arg1, %c0_i32 : i32, i32
  }
  func.func @transform_4(%arg0: i32, %arg1: i32) -> (i32, i32) {
    %c0_i32 = arith.constant 0 : i32
    %c0_i32_0 = arith.constant 0 : i32
    return %arg0, %c0_i32 : i32, i32
  }
  func.func @transform_5(%arg0: i32, %arg1: i32) -> (i32, i32) {
    %c0_i32 = arith.constant 0 : i32
    %c0_i32_0 = arith.constant 0 : i32
    return %arg0, %c0_i32 : i32, i32
  }
}

</mosaic_0001>

<llo_original>
// kernel: tpu_custom_call.1
$region0: #{tpu_custom_call.1}
  #allocation0 [shape = 'u32[]', space=smem, size = 0x4, offset = 0x4, fixed_abs, tag = 'smem constant byte address 0x4 - core index']
  #allocation1 [shape = 'u32[144,128]{1,0:T(1,128)}', space=vmem, size = 0x12000, scoped, tag = 'internal scratch']
  #allocation2 [shape = 'f32[128,128]{1,0:T(8,128)}', space=vmem, size = 0x10000, scoped, tag = 'scratch operand']
  #allocation3 [shape = 'f32[128,128]{1,0:T(8,128)}', space=vmem, size = 0x10000, scoped, tag = 'scratch operand']
  #allocation4 [shape = 'f32[128,128]{1,0:T(8,128)}', space=vmem, size = 0x10000, scoped, tag = 'scratch operand']
  #allocation5 [shape = 'f32[128,128]{1,0:T(8,128)}', space=vmem, size = 0x10000, scoped, tag = 'scratch operand']
  %s0 = inlined_call_operand.vmem [shape: s32[128,1], index: 0, kind: input, shape index: {}]
  %s1 = inlined_call_operand.vmem [shape: s32[1,128], index: 1, kind: input, shape index: {}]
  %s2 = inlined_call_operand.vmem [shape: f32[128,128], index: 2, kind: input, shape index: {}]
  %s3 = inlined_call_operand.hbm [shape: f32[128,128], index: 3, kind: input, shape index: {}]
  %s4 = inlined_call_operand.vmem [shape: f32[128,1], index: 4, kind: output, shape index: {0}]
  %s5 = inlined_call_operand.vmem [shape: f32[128,1], index: 5, kind: output, shape index: {1}]
  %6 = xla_tuple %s4, %s5
  %s7 = sld [smem:[#allocation0]]
  $region54: #{tpu_custom_call.1} parent=0
    _
  %s9 = ssub.s32 1, %s7
  %s10 = scalar_select 0, %s9, %s7
  $region1: #{tpu_custom_call.1} parent=0
    #allocation6 [shape = 'u8[65536]{0}', space=vmem, size = 0x10000, scoped, tag = 'input window, operand 3, single buffered']
    #allocation7 [shape = 's32[1]{0}', space=sflag, size = 0x4, scoped, tag = 'scoped memory for tpu_custom_call.1']
    %11 = vsyncpa [#allocation7], 0
    // Predicated region
    $region2: #{tpu_custom_call.1} parent=1 // pred_check
      _
    $region3: #{tpu_custom_call.1} parent=1 // pred_check_branch
      %13 = sbr.rel (0) target = $region5
    $region4: #{tpu_custom_call.1} parent=1 // pred_region
      _
    $region5: #{tpu_custom_call.1} parent=1 // pred_fallthru
      _
    // Predicated region
    $region6: #{tpu_custom_call.1} parent=1 // pred_check
      _
    $region7: #{tpu_custom_call.1} parent=1 // pred_check_branch
      %15 = sbr.rel (0) target = $region9
    $region8: #{tpu_custom_call.1} parent=1 // pred_region
      _
    $region9: #{tpu_custom_call.1} parent=1 // pred_fallthru
      _
    // Predicated region
    $region10: #{tpu_custom_call.1} parent=1 // pred_check
      _
    $region11: #{tpu_custom_call.1} parent=1 // pred_check_branch
      %17 = sbr.rel (0) target = $region13
    $region12: #{tpu_custom_call.1} parent=1 // pred_region
      _
    $region13: #{tpu_custom_call.1} parent=1 // pred_fallthru
      _
    // Predicated region
    $region14: #{tpu_custom_call.1} parent=1 // pred_check
      _
    $region15: #{tpu_custom_call.1} parent=1 // pred_check_branch
      %19 = sbr.rel (0) target = $region17
    $region16: #{tpu_custom_call.1} parent=1 // pred_region
      %s21 = ssub.s32 2048, 2048
      %22 = vsyncadd [#allocation7], %s21
      %s23 = sshll.u32 [#allocation6], 4
      %s24 = int_to_ptr.vmem [resolvable:$true] %s23
      %29 = dma.hbm_to_vmem [thread:$0]  %s3, 2048, %s24, [#allocation7], 128, 128, 8
    $region17: #{tpu_custom_call.1} parent=1 // pred_fallthru
      _
    // Predicated region
    $region18: #{tpu_custom_call.1} parent=1 // pred_check
      _
    $region19: #{tpu_custom_call.1} parent=1 // pred_check_branch
      %31 = sbr.rel (0) target = $region21
    $region20: #{tpu_custom_call.1} parent=1 // pred_region
      %32 = dma.done [#allocation7], 2048
    $region21: #{tpu_custom_call.1} parent=1 // pred_fallthru
      _
    %p33 = scmp.eq.s32.totalorder 0, 0
    // Predicated region
    $region22: #{tpu_custom_call.1} parent=1 // pred_check
      %p34 = pneg %p33
    $region23: #{tpu_custom_call.1} parent=1 // pred_check_branch
      %36 = sbr.rel (%p34) target = $region25
    $region24: #{tpu_custom_call.1} parent=1 // pred_region
      %v37 = vld [vmem:[%s2] sm:$0xff]
      %v38 = vld [vmem:[%s2 + $0x8] sm:$0xff]
      %v39 = vld [vmem:[%s2 + $0x10] sm:$0xff]
      %v40 = vld [vmem:[%s2 + $0x18] sm:$0xff]
      %v41 = vld [vmem:[%s2 + $0x20] sm:$0xff]
      %v42 = vld [vmem:[%s2 + $0x28] sm:$0xff]
      %v43 = vld [vmem:[%s2 + $0x30] sm:$0xff]
      %v44 = vld [vmem:[%s2 + $0x38] sm:$0xff]
      %v45 = vld [vmem:[%s2 + $0x40] sm:$0xff]
      %v46 = vld [vmem:[%s2 + $0x48] sm:$0xff]
      %v47 = vld [vmem:[%s2 + $0x50] sm:$0xff]
      %v48 = vld [vmem:[%s2 + $0x58] sm:$0xff]
      %v49 = vld [vmem:[%s2 + $0x60] sm:$0xff]
      %v50 = vld [vmem:[%s2 + $0x68] sm:$0xff]
      %v51 = vld [vmem:[%s2 + $0x70] sm:$0xff]
      %v52 = vld [vmem:[%s2 + $0x78] sm:$0xff]
      %v53 = vmul.f32 %v37, 14.285714
      %v54 = vmul.f32 %v38, 14.285714
      %v55 = vmul.f32 %v39, 14.285714
      %v56 = vmul.f32 %v40, 14.285714
      %v57 = vmul.f32 %v41, 14.285714
      %v58 = vmul.f32 %v42, 14.285714
      %v59 = vmul.f32 %v43, 14.285714
      %v60 = vmul.f32 %v44, 14.285714
      %v61 = vmul.f32 %v45, 14.285714
      %v62 = vmul.f32 %v46, 14.285714
      %v63 = vmul.f32 %v47, 14.285714
      %v64 = vmul.f32 %v48, 14.285714
      %v65 = vmul.f32 %v49, 14.285714
      %v66 = vmul.f32 %v50, 14.285714
      %v67 = vmul.f32 %v51, 14.285714
      %v68 = vmul.f32 %v52, 14.285714
      %69 = vst [vmem:[#allocation2] sm:$0xff] %v53
      %70 = vst [vmem:[#allocation2 + $0x8] sm:$0xff] %v54
      %71 = vst [vmem:[#allocation2 + $0x10] sm:$0xff] %v55
      %72 = vst [vmem:[#allocation2 + $0x18] sm:$0xff] %v56
      %73 = vst [vmem:[#allocation2 + $0x20] sm:$0xff] %v57
      %74 = vst [vmem:[#allocation2 + $0x28] sm:$0xff] %v58
      %75 = vst [vmem:[#allocation2 + $0x30] sm:$0xff] %v59
      %76 = vst [vmem:[#allocation2 + $0x38] sm:$0xff] %v60
      %77 = vst [vmem:[#allocation2 + $0x40] sm:$0xff] %v61
      %78 = vst [vmem:[#allocation2 + $0x48] sm:$0xff] %v62
      %79 = vst [vmem:[#allocation2 + $0x50] sm:$0xff] %v63
      %80 = vst [vmem:[#allocation2 + $0x58] sm:$0xff] %v64
      %81 = vst [vmem:[#allocation2 + $0x60] sm:$0xff] %v65
      %82 = vst [vmem:[#allocation2 + $0x68] sm:$0xff] %v66
      %83 = vst [vmem:[#allocation2 + $0x70] sm:$0xff] %v67
      %84 = vst [vmem:[#allocation2 + $0x78] sm:$0xff] %v68
      %85 = vst [vmem:[#allocation3] sm:$0xff] -1e+30
      %86 = vst [vmem:[#allocation3 + $0x8] sm:$0xff] -1e+30
      %87 = vst [vmem:[#allocation3 + $0x10] sm:$0xff] -1e+30
      %88 = vst [vmem:[#allocation3 + $0x18] sm:$0xff] -1e+30
      %89 = vst [vmem:[#allocation3 + $0x20] sm:$0xff] -1e+30
      %90 = vst [vmem:[#allocation3 + $0x28] sm:$0xff] -1e+30
      %91 = vst [vmem:[#allocation3 + $0x30] sm:$0xff] -1e+30
      %92 = vst [vmem:[#allocation3 + $0x38] sm:$0xff] -1e+30
      %93 = vst [vmem:[#allocation3 + $0x40] sm:$0xff] -1e+30
      %94 = vst [vmem:[#allocation3 + $0x48] sm:$0xff] -1e+30
      %95 = vst [vmem:[#allocation3 + $0x50] sm:$0xff] -1e+30
      %96 = vst [vmem:[#allocation3 + $0x58] sm:$0xff] -1e+30
      %97 = vst [vmem:[#allocation3 + $0x60] sm:$0xff] -1e+30
      %98 = vst [vmem:[#allocation3 + $0x68] sm:$0xff] -1e+30
      %99 = vst [vmem:[#allocation3 + $0x70] sm:$0xff] -1e+30
      %100 = vst [vmem:[#allocation3 + $0x78] sm:$0xff] -1e+30
      %101 = vst [vmem:[#allocation4] sm:$0xff] 0.0
      %102 = vst [vmem:[#allocation4 + $0x8] sm:$0xff] 0.0
      %103 = vst [vmem:[#allocation4 + $0x10] sm:$0xff] 0.0
      %104 = vst [vmem:[#allocation4 + $0x18] sm:$0xff] 0.0
      %105 = vst [vmem:[#allocation4 + $0x20] sm:$0xff] 0.0
      %106 = vst [vmem:[#allocation4 + $0x28] sm:$0xff] 0.0
      %107 = vst [vmem:[#allocation4 + $0x30] sm:$0xff] 0.0
      %108 = vst [vmem:[#allocation4 + $0x38] sm:$0xff] 0.0
      %109 = vst [vmem:[#allocation4 + $0x40] sm:$0xff] 0.0
      %110 = vst [vmem:[#allocation4 + $0x48] sm:$0xff] 0.0
      %111 = vst [vmem:[#allocation4 + $0x50] sm:$0xff] 0.0
      %112 = vst [vmem:[#allocation4 + $0x58] sm:$0xff] 0.0
      %113 = vst [vmem:[#allocation4 + $0x60] sm:$0xff] 0.0
      %114 = vst [vmem:[#allocation4 + $0x68] sm:$0xff] 0.0
      %115 = vst [vmem:[#allocation4 + $0x70] sm:$0xff] 0.0
      %116 = vst [vmem:[#allocation4 + $0x78] sm:$0xff] 0.0
      %117 = vst [vmem:[#allocation5] sm:$0xff] 0.0
      %118 = vst [vmem:[#allocation5 + $0x8] sm:$0xff] 0.0
      %119 = vst [vmem:[#allocation5 + $0x10] sm:$0xff] 0.0
      %120 = vst [vmem:[#allocation5 + $0x18] sm:$0xff] 0.0
      %121 = vst [vmem:[#allocation5 + $0x20] sm:$0xff] 0.0
      %122 = vst [vmem:[#allocation5 + $0x28] sm:$0xff] 0.0
      %123 = vst [vmem:[#allocation5 + $0x30] sm:$0xff] 0.0
      %124 = vst [vmem:[#allocation5 + $0x38] sm:$0xff] 0.0
      %125 = vst [vmem:[#allocation5 + $0x40] sm:$0xff] 0.0
      %126 = vst [vmem:[#allocation5 + $0x48] sm:$0xff] 0.0
      %127 = vst [vmem:[#allocation5 + $0x50] sm:$0xff] 0.0
      %128 = vst [vmem:[#allocation5 + $0x58] sm:$0xff] 0.0
      %129 = vst [vmem:[#allocation5 + $0x60] sm:$0xff] 0.0
      %130 = vst [vmem:[#allocation5 + $0x68] sm:$0xff] 0.0
      %131 = vst [vmem:[#allocation5 + $0x70] sm:$0xff] 0.0
      %132 = vst [vmem:[#allocation5 + $0x78] sm:$0xff] 0.0
    $region25: #{tpu_custom_call.1} parent=1 // pred_fallthru
      _
    %v133 = vld [vmem:[#allocation2] sm:$0xff]
    %v134 = vld [vmem:[#allocation2 + $0x8] sm:$0xff]
    %v135 = vld [vmem:[#allocation2 + $0x10] sm:$0xff]
    %v136 = vld [vmem:[#allocation2 + $0x18] sm:$0xff]
    %v137 = vld [vmem:[#allocation2 + $0x20] sm:$0xff]
    %v138 = vld [vmem:[#allocation2 + $0x28] sm:$0xff]
    %v139 = vld [vmem:[#allocation2 + $0x30] sm:$0xff]
    %v140 = vld [vmem:[#allocation2 + $0x38] sm:$0xff]
    %v141 = vld [vmem:[#allocation2 + $0x40] sm:$0xff]
    %v142 = vld [vmem:[#allocation2 + $0x48] sm:$0xff]
    %v143 = vld [vmem:[#allocation2 + $0x50] sm:$0xff]
    %v144 = vld [vmem:[#allocation2 + $0x58] sm:$0xff]
    %v145 = vld [vmem:[#allocation2 + $0x60] sm:$0xff]
    %v146 = vld [vmem:[#allocation2 + $0x68] sm:$0xff]
    %v147 = vld [vmem:[#allocation2 + $0x70] sm:$0xff]
    %v148 = vld [vmem:[#allocation2 + $0x78] sm:$0xff]
    %v149 = vld [vmem:[#allocation6] sm:$0xff]
    %v150 = vld [vmem:[#allocation6 + $0x8] sm:$0xff]
    %v151 = vld [vmem:[#allocation6 + $0x10] sm:$0xff]
    %v152 = vld [vmem:[#allocation6 + $0x18] sm:$0xff]
    %v153 = vld [vmem:[#allocation6 + $0x20] sm:$0xff]
    %v154 = vld [vmem:[#allocation6 + $0x28] sm:$0xff]
    %v155 = vld [vmem:[#allocation6 + $0x30] sm:$0xff]
    %v156 = vld [vmem:[#allocation6 + $0x38] sm:$0xff]
    %v157 = vld [vmem:[#allocation6 + $0x40] sm:$0xff]
    %v158 = vld [vmem:[#allocation6 + $0x48] sm:$0xff]
    %v159 = vld [vmem:[#allocation6 + $0x50] sm:$0xff]
    %v160 = vld [vmem:[#allocation6 + $0x58] sm:$0xff]
    %v161 = vld [vmem:[#allocation6 + $0x60] sm:$0xff]
    %v162 = vld [vmem:[#allocation6 + $0x68] sm:$0xff]
    %v163 = vld [vmem:[#allocation6 + $0x70] sm:$0xff]
    %v164 = vld [vmem:[#allocation6 + $0x78] sm:$0xff]
    %165 = vmatprep.subr.mxu0 0.0
    %166 = vmatpush1.xpose.msra.mxu0 %v164
    %167 = vmatprep.subr.mxu0 0.0
    %168 = vmatpush1.xpose.msra.mxu0 %v163
    %169 = vmatprep.subr.mxu0 0.0
    %170 = vmatpush1.xpose.msra.mxu0 %v162
    %171 = vmatprep.subr.mxu0 0.0
    %172 = vmatpush1.xpose.msra.mxu0 %v161
    %173 = vmatprep.subr.mxu0 0.0
    %174 = vmatpush1.xpose.msra.mxu0 %v160
    %175 = vmatprep.subr.mxu0 0.0
    %176 = vmatpush1.xpose.msra.mxu0 %v159
    %177 = vmatprep.subr.mxu0 0.0
    %178 = vmatpush1.xpose.msra.mxu0 %v158
    %179 = vmatprep.subr.mxu0 0.0
    %180 = vmatpush1.xpose.msra.mxu0 %v157
    %181 = vmatprep.subr.mxu0 0.0
    %182 = vmatpush1.xpose.msra.mxu0 %v156
    %183 = vmatprep.subr.mxu0 0.0
    %184 = vmatpush1.xpose.msra.mxu0 %v155
    %185 = vmatprep.subr.mxu0 0.0
    %186 = vmatpush1.xpose.msra.mxu0 %v154
    %187 = vmatprep.subr.mxu0 0.0
    %188 = vmatpush1.xpose.msra.mxu0 %v153
    %189 = vmatprep.subr.mxu0 0.0
    %190 = vmatpush1.xpose.msra.mxu0 %v152
    %191 = vmatprep.subr.mxu0 0.0
    %192 = vmatpush1.xpose.msra.mxu0 %v151
    %193 = vmatprep.subr.mxu0 0.0
    %194 = vmatpush1.xpose.msra.mxu0 %v150
    %195 = vmatprep.subr.mxu0 0.0
    %196 = vmatpush1.xpose.msra.mxu0 %v149
    %197 = vmatprep.subr.mxu0 0.0
    %198 = vmatpush2.xpose.msra.mxu0 0.0
    %199 = vmatprep.subr.mxu0 0.0
    %200 = vmatpush2.xpose.msra.mxu0 0.0
    %201 = vmatprep.subr.mxu0 0.0
    %202 = vmatpush2.xpose.msra.mxu0 0.0
    %203 = vmatprep.subr.mxu0 0.0
    %204 = vmatpush2.xpose.msra.mxu0 0.0
    %205 = vmatprep.subr.mxu0 0.0
    %206 = vmatpush2.xpose.msra.mxu0 0.0
    %207 = vmatprep.subr.mxu0 0.0
    %208 = vmatpush2.xpose.msra.mxu0 0.0
    %209 = vmatprep.subr.mxu0 0.0
    %210 = vmatpush2.xpose.msra.mxu0 0.0
    %211 = vmatprep.subr.mxu0 0.0
    %212 = vmatpush2.xpose.msra.mxu0 0.0
    %213 = vmatprep.subr.mxu0 0.0
    %214 = vmatpush2.xpose.msra.mxu0 0.0
    %215 = vmatprep.subr.mxu0 0.0
    %216 = vmatpush2.xpose.msra.mxu0 0.0
    %217 = vmatprep.subr.mxu0 0.0
    %218 = vmatpush2.xpose.msra.mxu0 0.0
    %219 = vmatprep.subr.mxu0 0.0
    %220 = vmatpush2.xpose.msra.mxu0 0.0
    %221 = vmatprep.subr.mxu0 0.0
    %222 = vmatpush2.xpose.msra.mxu0 0.0
    %223 = vmatprep.subr.mxu0 0.0
    %224 = vmatpush2.xpose.msra.mxu0 0.0
    %225 = vmatprep.subr.mxu0 0.0
    %226 = vmatpush2.xpose.msra.mxu0 0.0
    %227 = vmatprep.subr.mxu0 0.0
    %228 = vmatpush2.xpose.msra.mxu0 0.0
    %229 = vmatprep.mubr.f32.mxu0 0.0
    %230 = vmatmul.mubr.f32.gmra.mxu0 %v133
    %v231 = vpop.f32.mrf.mxu0
    %v232 = vadd.f32 0.0, %v231
    %v233 = vpop.f32.mrf.mxu0
    %234 = vmatprep.mubr.f32.mxu0 0.0
    %235 = vmatmul.mubr.f32.gmra.mxu0 %v134
    %v236 = vpop.f32.mrf.mxu0
    %v237 = vadd.f32 0.0, %v236
    %v238 = vpop.f32.mrf.mxu0
    %239 = vmatprep.mubr.f32.mxu0 0.0
    %240 = vmatmul.mubr.f32.gmra.mxu0 %v135
    %v241 = vpop.f32.mrf.mxu0
    %v242 = vadd.f32 0.0, %v241
    %v243 = vpop.f32.mrf.mxu0
    %244 = vmatprep.mubr.f32.mxu0 0.0
    %245 = vmatmul.mubr.f32.gmra.mxu0 %v136
    %v246 = vpop.f32.mrf.mxu0
    %v247 = vadd.f32 0.0, %v246
    %v248 = vpop.f32.mrf.mxu0
    %249 = vmatprep.mubr.f32.mxu0 0.0
    %250 = vmatmul.mubr.f32.gmra.mxu0 %v137
    %v251 = vpop.f32.mrf.mxu0
    %v252 = vadd.f32 0.0, %v251
    %v253 = vpop.f32.mrf.mxu0
    %254 = vmatprep.mubr.f32.mxu0 0.0
    %255 = vmatmul.mubr.f32.gmra.mxu0 %v138
    %v256 = vpop.f32.mrf.mxu0
    %v257 = vadd.f32 0.0, %v256
    %v258 = vpop.f32.mrf.mxu0
    %259 = vmatprep.mubr.f32.mxu0 0.0
    %260 = vmatmul.mubr.f32.gmra.mxu0 %v139
    %v261 = vpop.f32.mrf.mxu0
    %v262 = vadd.f32 0.0, %v261
    %v263 = vpop.f32.mrf.mxu0
    %264 = vmatprep.mubr.f32.mxu0 0.0
    %265 = vmatmul.mubr.f32.gmra.mxu0 %v140
    %v266 = vpop.f32.mrf.mxu0
    %v267 = vadd.f32 0.0, %v266
    %v268 = vpop.f32.mrf.mxu0
    %269 = vmatprep.mubr.f32.mxu0 0.0
    %270 = vmatmul.mubr.f32.gmra.mxu0 %v141
    %v271 = vpop.f32.mrf.mxu0
    %v272 = vadd.f32 0.0, %v271
    %v273 = vpop.f32.mrf.mxu0
    %274 = vmatprep.mubr.f32.mxu0 0.0
    %275 = vmatmul.mubr.f32.gmra.mxu0 %v142
    %v276 = vpop.f32.mrf.mxu0
    %v277 = vadd.f32 0.0, %v276
    %v278 = vpop.f32.mrf.mxu0
    %279 = vmatprep.mubr.f32.mxu0 0.0
    %280 = vmatmul.mubr.f32.gmra.mxu0 %v143
    %v281 = vpop.f32.mrf.mxu0
    %v282 = vadd.f32 0.0, %v281
    %v283 = vpop.f32.mrf.mxu0
    %284 = vmatprep.mubr.f32.mxu0 0.0
    %285 = vmatmul.mubr.f32.gmra.mxu0 %v144
    %v286 = vpop.f32.mrf.mxu0
    %v287 = vadd.f32 0.0, %v286
    %v288 = vpop.f32.mrf.mxu0
    %289 = vmatprep.mubr.f32.mxu0 0.0
    %290 = vmatmul.mubr.f32.gmra.mxu0 %v145
    %v291 = vpop.f32.mrf.mxu0
    %v292 = vadd.f32 0.0, %v291
    %v293 = vpop.f32.mrf.mxu0
    %294 = vmatprep.mubr.f32.mxu0 0.0
    %295 = vmatmul.mubr.f32.gmra.mxu0 %v146
    %v296 = vpop.f32.mrf.mxu0
    %v297 = vadd.f32 0.0, %v296
    %v298 = vpop.f32.mrf.mxu0
    %299 = vmatprep.mubr.f32.mxu0 0.0
    %300 = vmatmul.mubr.f32.gmra.mxu0 %v147
    %v301 = vpop.f32.mrf.mxu0
    %v302 = vadd.f32 0.0, %v301
    %v303 = vpop.f32.mrf.mxu0
    %304 = vmatprep.mubr.f32.mxu0 0.0
    %305 = vmatmul.mubr.f32.gmra.mxu0 %v148
    %v306 = vpop.f32.mrf.mxu0
    %v307 = vadd.f32 0.0, %v306
    %v308 = vpop.f32.mrf.mxu0
    %309 = vdwg.mxu0
    %v310 = vld [vmem:[#allocation3] sm:$0xff]
    %v311 = vld [vmem:[#allocation3 + $0x8] sm:$0xff]
    %v312 = vld [vmem:[#allocation3 + $0x10] sm:$0xff]
    %v313 = vld [vmem:[#allocation3 + $0x18] sm:$0xff]
    %v314 = vld [vmem:[#allocation3 + $0x20] sm:$0xff]
    %v315 = vld [vmem:[#allocation3 + $0x28] sm:$0xff]
    %v316 = vld [vmem:[#allocation3 + $0x30] sm:$0xff]
    %v317 = vld [vmem:[#allocation3 + $0x38] sm:$0xff]
    %v318 = vld [vmem:[#allocation3 + $0x40] sm:$0xff]
    %v319 = vld [vmem:[#allocation3 + $0x48] sm:$0xff]
    %v320 = vld [vmem:[#allocation3 + $0x50] sm:$0xff]
    %v321 = vld [vmem:[#allocation3 + $0x58] sm:$0xff]
    %v322 = vld [vmem:[#allocation3 + $0x60] sm:$0xff]
    %v323 = vld [vmem:[#allocation3 + $0x68] sm:$0xff]
    %v324 = vld [vmem:[#allocation3 + $0x70] sm:$0xff]
    %v325 = vld [vmem:[#allocation3 + $0x78] sm:$0xff]
    %326 = vmax.xlane.f32.xlu0 %v232
    %v327 = vpop.xlane.xlu0 %326
    %328 = vmax.xlane.f32.xlu0 %v237
    %v329 = vpop.xlane.xlu0 %328
    %330 = vmax.xlane.f32.xlu0 %v242
    %v331 = vpop.xlane.xlu0 %330
    %332 = vmax.xlane.f32.xlu0 %v247
    %v333 = vpop.xlane.xlu0 %332
    %334 = vmax.xlane.f32.xlu0 %v252
    %v335 = vpop.xlane.xlu0 %334
    %336 = vmax.xlane.f32.xlu0 %v257
    %v337 = vpop.xlane.xlu0 %336
    %338 = vmax.xlane.f32.xlu0 %v262
    %v339 = vpop.xlane.xlu0 %338
    %340 = vmax.xlane.f32.xlu0 %v267
    %v341 = vpop.xlane.xlu0 %340
    %342 = vmax.xlane.f32.xlu0 %v272
    %v343 = vpop.xlane.xlu0 %342
    %344 = vmax.xlane.f32.xlu0 %v277
    %v345 = vpop.xlane.xlu0 %344
    %346 = vmax.xlane.f32.xlu0 %v282
    %v347 = vpop.xlane.xlu0 %346
    %348 = vmax.xlane.f32.xlu0 %v287
    %v349 = vpop.xlane.xlu0 %348
    %350 = vmax.xlane.f32.xlu0 %v292
    %v351 = vpop.xlane.xlu0 %350
    %352 = vmax.xlane.f32.xlu0 %v297
    %v353 = vpop.xlane.xlu0 %352
    %354 = vmax.xlane.f32.xlu0 %v302
    %v355 = vpop.xlane.xlu0 %354
    %356 = vmax.xlane.f32.xlu0 %v307
    %v357 = vpop.xlane.xlu0 %356
    %v358 = vmax.f32 %v310, %v327
    %v359 = vmax.f32 %v311, %v329
    %v360 = vmax.f32 %v312, %v331
    %v361 = vmax.f32 %v313, %v333
    %v362 = vmax.f32 %v314, %v335
    %v363 = vmax.f32 %v315, %v337
    %v364 = vmax.f32 %v316, %v339
    %v365 = vmax.f32 %v317, %v341
    %v366 = vmax.f32 %v318, %v343
    %v367 = vmax.f32 %v319, %v345
    %v368 = vmax.f32 %v320, %v347
    %v369 = vmax.f32 %v321, %v349
    %v370 = vmax.f32 %v322, %v351
    %v371 = vmax.f32 %v323, %v353
    %v372 = vmax.f32 %v324, %v355
    %v373 = vmax.f32 %v325, %v357
    %v374 = vsub.f32 %v310, %v358
    %v375 = vsub.f32 %v311, %v359
    %v376 = vsub.f32 %v312, %v360
    %v377 = vsub.f32 %v313, %v361
    %v378 = vsub.f32 %v314, %v362
    %v379 = vsub.f32 %v315, %v363
    %v380 = vsub.f32 %v316, %v364
    %v381 = vsub.f32 %v317, %v365
    %v382 = vsub.f32 %v318, %v366
    %v383 = vsub.f32 %v319, %v367
    %v384 = vsub.f32 %v320, %v368
    %v385 = vsub.f32 %v321, %v369
    %v386 = vsub.f32 %v322, %v370
    %v387 = vsub.f32 %v323, %v371
    %v388 = vsub.f32 %v324, %v372
    %v389 = vsub.f32 %v325, %v373
    %v390 = vmul.f32 %v374, 1.442695
    %v391 = vpow.pop %v390
    %v392 = vmul.f32 %v375, 1.442695
    %v393 = vpow.pop %v392
    %v394 = vmul.f32 %v376, 1.442695
    %v395 = vpow.pop %v394
    %v396 = vmul.f32 %v377, 1.442695
    %v397 = vpow.pop %v396
    %v398 = vmul.f32 %v378, 1.442695
    %v399 = vpow.pop %v398
    %v400 = vmul.f32 %v379, 1.442695
    %v401 = vpow.pop %v400
    %v402 = vmul.f32 %v380, 1.442695
    %v403 = vpow.pop %v402
    %v404 = vmul.f32 %v381, 1.442695
    %v405 = vpow.pop %v404
    %v406 = vmul.f32 %v382, 1.442695
    %v407 = vpow.pop %v406
    %v408 = vmul.f32 %v383, 1.442695
    %v409 = vpow.pop %v408
    %v410 = vmul.f32 %v384, 1.442695
    %v411 = vpow.pop %v410
    %v412 = vmul.f32 %v385, 1.442695
    %v413 = vpow.pop %v412
    %v414 = vmul.f32 %v386, 1.442695
    %v415 = vpow.pop %v414
    %v416 = vmul.f32 %v387, 1.442695
    %v417 = vpow.pop %v416
    %v418 = vmul.f32 %v388, 1.442695
    %v419 = vpow.pop %v418
    %v420 = vmul.f32 %v389, 1.442695
    %v421 = vpow.pop %v420
    %v422 = vsub.f32 %v232, %v358
    %v423 = vsub.f32 %v237, %v359
    %v424 = vsub.f32 %v242, %v360
    %v425 = vsub.f32 %v247, %v361
    %v426 = vsub.f32 %v252, %v362
    %v427 = vsub.f32 %v257, %v363
    %v428 = vsub.f32 %v262, %v364
    %v429 = vsub.f32 %v267, %v365
    %v430 = vsub.f32 %v272, %v366
    %v431 = vsub.f32 %v277, %v367
    %v432 = vsub.f32 %v282, %v368
    %v433 = vsub.f32 %v287, %v369
    %v434 = vsub.f32 %v292, %v370
    %v435 = vsub.f32 %v297, %v371
    %v436 = vsub.f32 %v302, %v372
    %v437 = vsub.f32 %v307, %v373
    %v438 = vmul.f32 %v422, 1.442695
    %v439 = vpow.pop %v438
    %v440 = vmul.f32 %v423, 1.442695
    %v441 = vpow.pop %v440
    %v442 = vmul.f32 %v424, 1.442695
    %v443 = vpow.pop %v442
    %v444 = vmul.f32 %v425, 1.442695
    %v445 = vpow.pop %v444
    %v446 = vmul.f32 %v426, 1.442695
    %v447 = vpow.pop %v446
    %v448 = vmul.f32 %v427, 1.442695
    %v449 = vpow.pop %v448
    %v450 = vmul.f32 %v428, 1.442695
    %v451 = vpow.pop %v450
    %v452 = vmul.f32 %v429, 1.442695
    %v453 = vpow.pop %v452
    %v454 = vmul.f32 %v430, 1.442695
    %v455 = vpow.pop %v454
    %v456 = vmul.f32 %v431, 1.442695
    %v457 = vpow.pop %v456
    %v458 = vmul.f32 %v432, 1.442695
    %v459 = vpow.pop %v458
    %v460 = vmul.f32 %v433, 1.442695
    %v461 = vpow.pop %v460
    %v462 = vmul.f32 %v434, 1.442695
    %v463 = vpow.pop %v462
    %v464 = vmul.f32 %v435, 1.442695
    %v465 = vpow.pop %v464
    %v466 = vmul.f32 %v436, 1.442695
    %v467 = vpow.pop %v466
    %v468 = vmul.f32 %v437, 1.442695
    %v469 = vpow.pop %v468
    %v470 = vld [vmem:[#allocation4] sm:$0xff]
    %v471 = vld [vmem:[#allocation4 + $0x8] sm:$0xff]
    %v472 = vld [vmem:[#allocation4 + $0x10] sm:$0xff]
    %v473 = vld [vmem:[#allocation4 + $0x18] sm:$0xff]
    %v474 = vld [vmem:[#allocation4 + $0x20] sm:$0xff]
    %v475 = vld [vmem:[#allocation4 + $0x28] sm:$0xff]
    %v476 = vld [vmem:[#allocation4 + $0x30] sm:$0xff]
    %v477 = vld [vmem:[#allocation4 + $0x38] sm:$0xff]
    %v478 = vld [vmem:[#allocation4 + $0x40] sm:$0xff]
    %v479 = vld [vmem:[#allocation4 + $0x48] sm:$0xff]
    %v480 = vld [vmem:[#allocation4 + $0x50] sm:$0xff]
    %v481 = vld [vmem:[#allocation4 + $0x58] sm:$0xff]
    %v482 = vld [vmem:[#allocation4 + $0x60] sm:$0xff]
    %v483 = vld [vmem:[#allocation4 + $0x68] sm:$0xff]
    %v484 = vld [vmem:[#allocation4 + $0x70] sm:$0xff]
    %v485 = vld [vmem:[#allocation4 + $0x78] sm:$0xff]
    %v486 = vmul.f32 %v391, %v470
    %v487 = vmul.f32 %v393, %v471
    %v488 = vmul.f32 %v395, %v472
    %v489 = vmul.f32 %v397, %v473
    %v490 = vmul.f32 %v399, %v474
    %v491 = vmul.f32 %v401, %v475
    %v492 = vmul.f32 %v403, %v476
    %v493 = vmul.f32 %v405, %v477
    %v494 = vmul.f32 %v407, %v478
    %v495 = vmul.f32 %v409, %v479
    %v496 = vmul.f32 %v411, %v480
    %v497 = vmul.f32 %v413, %v481
    %v498 = vmul.f32 %v415, %v482
    %v499 = vmul.f32 %v417, %v483
    %v500 = vmul.f32 %v419, %v484
    %v501 = vmul.f32 %v421, %v485
    %v502 = vld [vmem:[#allocation5] sm:$0xff]
    %v503 = vld [vmem:[#allocation5 + $0x8] sm:$0xff]
    %v504 = vld [vmem:[#allocation5 + $0x10] sm:$0xff]
    %v505 = vld [vmem:[#allocation5 + $0x18] sm:$0xff]
    %v506 = vld [vmem:[#allocation5 + $0x20] sm:$0xff]
    %v507 = vld [vmem:[#allocation5 + $0x28] sm:$0xff]
    %v508 = vld [vmem:[#allocation5 + $0x30] sm:$0xff]
    %v509 = vld [vmem:[#allocation5 + $0x38] sm:$0xff]
    %v510 = vld [vmem:[#allocation5 + $0x40] sm:$0xff]
    %v511 = vld [vmem:[#allocation5 + $0x48] sm:$0xff]
    %v512 = vld [vmem:[#allocation5 + $0x50] sm:$0xff]
    %v513 = vld [vmem:[#allocation5 + $0x58] sm:$0xff]
    %v514 = vld [vmem:[#allocation5 + $0x60] sm:$0xff]
    %v515 = vld [vmem:[#allocation5 + $0x68] sm:$0xff]
    %v516 = vld [vmem:[#allocation5 + $0x70] sm:$0xff]
    %v517 = vld [vmem:[#allocation5 + $0x78] sm:$0xff]
    %v518 = vld [vmem:[%s0] sm:$0xff]
    %v519 = vld [vmem:[%s0 + $0x8] sm:$0xff]
    %v520 = vld [vmem:[%s0 + $0x10] sm:$0xff]
    %v521 = vld [vmem:[%s0 + $0x18] sm:$0xff]
    %v522 = vld [vmem:[%s0 + $0x20] sm:$0xff]
    %v523 = vld [vmem:[%s0 + $0x28] sm:$0xff]
    %v524 = vld [vmem:[%s0 + $0x30] sm:$0xff]
    %v525 = vld [vmem:[%s0 + $0x38] sm:$0xff]
    %v526 = vld [vmem:[%s0 + $0x40] sm:$0xff]
    %v527 = vld [vmem:[%s0 + $0x48] sm:$0xff]
    %v528 = vld [vmem:[%s0 + $0x50] sm:$0xff]
    %v529 = vld [vmem:[%s0 + $0x58] sm:$0xff]
    %v530 = vld [vmem:[%s0 + $0x60] sm:$0xff]
    %v531 = vld [vmem:[%s0 + $0x68] sm:$0xff]
    %v532 = vld [vmem:[%s0 + $0x70] sm:$0xff]
    %v533 = vld [vmem:[%s0 + $0x78] sm:$0xff]
    %v534 = vld [vmem:[%s1] sm:$0x1]
    %535 = vset.pattern.permute.xlu0 0
    %536 = vperm.xlu0 %535, %v518
    %v537 = vpop.permute.xlu0 %536
    %538 = vset.pattern.permute.xlu0 0
    %539 = vperm.xlu0 %538, %v519
    %v540 = vpop.permute.xlu0 %539
    %541 = vset.pattern.permute.xlu0 0
    %542 = vperm.xlu0 %541, %v520
    %v543 = vpop.permute.xlu0 %542
    %544 = vset.pattern.permute.xlu0 0
    %545 = vperm.xlu0 %544, %v521
    %v546 = vpop.permute.xlu0 %545
    %547 = vset.pattern.permute.xlu0 0
    %548 = vperm.xlu0 %547, %v522
    %v549 = vpop.permute.xlu0 %548
    %550 = vset.pattern.permute.xlu0 0
    %551 = vperm.xlu0 %550, %v523
    %v552 = vpop.permute.xlu0 %551
    %553 = vset.pattern.permute.xlu0 0
    %554 = vperm.xlu0 %553, %v524
    %v555 = vpop.permute.xlu0 %554
    %556 = vset.pattern.permute.xlu0 0
    %557 = vperm.xlu0 %556, %v525
    %v558 = vpop.permute.xlu0 %557
    %559 = vset.pattern.permute.xlu0 0
    %560 = vperm.xlu0 %559, %v526
    %v561 = vpop.permute.xlu0 %560
    %562 = vset.pattern.permute.xlu0 0
    %563 = vperm.xlu0 %562, %v527
    %v564 = vpop.permute.xlu0 %563
    %565 = vset.pattern.permute.xlu0 0
    %566 = vperm.xlu0 %565, %v528
    %v567 = vpop.permute.xlu0 %566
    %568 = vset.pattern.permute.xlu0 0
    %569 = vperm.xlu0 %568, %v529
    %v570 = vpop.permute.xlu0 %569
    %571 = vset.pattern.permute.xlu0 0
    %572 = vperm.xlu0 %571, %v530
    %v573 = vpop.permute.xlu0 %572
    %574 = vset.pattern.permute.xlu0 0
    %575 = vperm.xlu0 %574, %v531
    %v576 = vpop.permute.xlu0 %575
    %577 = vset.pattern.permute.xlu0 0
    %578 = vperm.xlu0 %577, %v532
    %v579 = vpop.permute.xlu0 %578
    %580 = vset.pattern.permute.xlu0 0
    %581 = vperm.xlu0 %580, %v533
    %v582 = vpop.permute.xlu0 %581
    %v583 = vlaneseq
    %v584 = vshrl.u32 %v583, 7
    %v585 = vsub.s32 0, %v584
    %v586 = vrot.slane %v534, %v585
    %vm587 = vcmp.eq.s32.totalorder %v537, %v586
    %vm588 = vcmp.eq.s32.totalorder %v540, %v586
    %vm589 = vcmp.eq.s32.totalorder %v543, %v586
    %vm590 = vcmp.eq.s32.totalorder %v546, %v586
    %vm591 = vcmp.eq.s32.totalorder %v549, %v586
    %vm592 = vcmp.eq.s32.totalorder %v552, %v586
    %vm593 = vcmp.eq.s32.totalorder %v555, %v586
    %vm594 = vcmp.eq.s32.totalorder %v558, %v586
    %vm595 = vcmp.eq.s32.totalorder %v561, %v586
    %vm596 = vcmp.eq.s32.totalorder %v564, %v586
    %vm597 = vcmp.eq.s32.totalorder %v567, %v586
    %vm598 = vcmp.eq.s32.totalorder %v570, %v586
    %vm599 = vcmp.eq.s32.totalorder %v573, %v586
    %vm600 = vcmp.eq.s32.totalorder %v576, %v586
    %vm601 = vcmp.eq.s32.totalorder %v579, %v586
    %vm602 = vcmp.eq.s32.totalorder %v582, %v586
    %v603 = vsel %vm587, %v232, 0.0
    %v604 = vsel %vm588, %v237, 0.0
    %v605 = vsel %vm589, %v242, 0.0
    %v606 = vsel %vm590, %v247, 0.0
    %v607 = vsel %vm591, %v252, 0.0
    %v608 = vsel %vm592, %v257, 0.0
    %v609 = vsel %vm593, %v262, 0.0
    %v610 = vsel %vm594, %v267, 0.0
    %v611 = vsel %vm595, %v272, 0.0
    %v612 = vsel %vm596, %v277, 0.0
    %v613 = vsel %vm597, %v282, 0.0
    %v614 = vsel %vm598, %v287, 0.0
    %v615 = vsel %vm599, %v292, 0.0
    %v616 = vsel %vm600, %v297, 0.0
    %v617 = vsel %vm601, %v302, 0.0
    %v618 = vsel %vm602, %v307, 0.0
    %s619 = smul.u32 0, 128
    %s620 = sadd.s32 0, 1
    %s621 = smul.u32 %s620, 128
    %p622 = scmp.lt.s32.totalorder %s619, %s621
    %s623 = smul.u32 0, 128
    %s624 = sadd.s32 0, 1
    %s625 = smul.u32 %s624, 128
    %p626 = scmp.lt.s32.totalorder %s623, %s625
    %p627 = pnand %p622, %p626
    %p628 = pneg %p627
    %p629 = por %p628, %p33
    // Predicated region
    $region26: #{tpu_custom_call.1} parent=1 // pred_check
      %p630 = pneg %p629
    $region27: #{tpu_custom_call.1} parent=1 // pred_check_branch
      %632 = sbr.rel (%p630) target = $region29
    $region28: #{tpu_custom_call.1} parent=1 // pred_region
      %v633 = vlaneseq
      %v634 = vshrl.u32 %v633, 7
      %v635 = vadd.s32 %v634, 8
      %v636 = vadd.s32 %v634, 16
      %v637 = vadd.s32 %v634, 24
      %v638 = vadd.s32 %v634, 32
      %v639 = vadd.s32 %v634, 40
      %v640 = vadd.s32 %v634, 48
      %v641 = vadd.s32 %v634, 56
      %v642 = vadd.s32 %v634, 64
      %v643 = vadd.s32 %v634, 72
      %v644 = vadd.s32 %v634, 80
      %v645 = vadd.s32 %v634, 88
      %v646 = vadd.s32 %v634, 96
      %v647 = vadd.s32 %v634, 104
      %v648 = vadd.s32 %v634, 112
      %v649 = vadd.s32 %v634, 120
      %v650 = vstv %s619
      %v651 = vadd.s32 %v650, %v634
      %v652 = vadd.s32 %v650, %v635
      %v653 = vadd.s32 %v650, %v636
      %v654 = vadd.s32 %v650, %v637
      %v655 = vadd.s32 %v650, %v638
      %v656 = vadd.s32 %v650, %v639
      %v657 = vadd.s32 %v650, %v640
      %v658 = vadd.s32 %v650, %v641
      %v659 = vadd.s32 %v650, %v642
      %v660 = vadd.s32 %v650, %v643
      %v661 = vadd.s32 %v650, %v644
      %v662 = vadd.s32 %v650, %v645
      %v663 = vadd.s32 %v650, %v646
      %v664 = vadd.s32 %v650, %v647
      %v665 = vadd.s32 %v650, %v648
      %v666 = vadd.s32 %v650, %v649
      %v667 = vlaneseq
      %v668 = vand.u32 %v667, 127
      %v669 = vstv %s623
      %v670 = vadd.s32 %v669, %v668
      %vm671 = vcmp.lt.s32.totalorder %v670, 16
      %vm672 = vcmp.ne.s32.totalorder %v651, %v670
      %vm673 = vcmp.ne.s32.totalorder %v652, %v670
      %vm674 = vcmp.ne.s32.totalorder %v653, %v670
      %vm675 = vcmp.ne.s32.totalorder %v654, %v670
      %vm676 = vcmp.ne.s32.totalorder %v655, %v670
      %vm677 = vcmp.ne.s32.totalorder %v656, %v670
      %vm678 = vcmp.ne.s32.totalorder %v657, %v670
      %vm679 = vcmp.ne.s32.totalorder %v658, %v670
      %vm680 = vcmp.ne.s32.totalorder %v659, %v670
      %vm681 = vcmp.ne.s32.totalorder %v660, %v670
      %vm682 = vcmp.ne.s32.totalorder %v661, %v670
      %vm683 = vcmp.ne.s32.totalorder %v662, %v670
      %vm684 = vcmp.ne.s32.totalorder %v663, %v670
      %vm685 = vcmp.ne.s32.totalorder %v664, %v670
      %vm686 = vcmp.ne.s32.totalorder %v665, %v670
      %vm687 = vcmp.ne.s32.totalorder %v666, %v670
      %vm688 = vmand %vm671, %vm672
      %vm689 = vmand %vm671, %vm673
      %vm690 = vmand %vm671, %vm674
      %vm691 = vmand %vm671, %vm675
      %vm692 = vmand %vm671, %vm676
      %vm693 = vmand %vm671, %vm677
      %vm694 = vmand %vm671, %vm678
      %vm695 = vmand %vm671, %vm679
      %vm696 = vmand %vm671, %vm680
      %vm697 = vmand %vm671, %vm681
      %vm698 = vmand %vm671, %vm682
      %vm699 = vmand %vm671, %vm683
      %vm700 = vmand %vm671, %vm684
      %vm701 = vmand %vm671, %vm685
      %vm702 = vmand %vm671, %vm686
      %vm703 = vmand %vm671, %vm687
      %v704 = vsel %vm688, %v439, 0.0
      %v705 = vsel %vm689, %v441, 0.0
      %v706 = vsel %vm690, %v443, 0.0
      %v707 = vsel %vm691, %v445, 0.0
      %v708 = vsel %vm692, %v447, 0.0
      %v709 = vsel %vm693, %v449, 0.0
      %v710 = vsel %vm694, %v451, 0.0
      %v711 = vsel %vm695, %v453, 0.0
      %v712 = vsel %vm696, %v455, 0.0
      %v713 = vsel %vm697, %v457, 0.0
      %v714 = vsel %vm698, %v459, 0.0
      %v715 = vsel %vm699, %v461, 0.0
      %v716 = vsel %vm700, %v463, 0.0
      %v717 = vsel %vm701, %v465, 0.0
      %v718 = vsel %vm702, %v467, 0.0
      %v719 = vsel %vm703, %v469, 0.0
      %720 = vadd.xlane.f32.xlu0 %v704
      %v721 = vpop.xlane.xlu0 %720
      %722 = vadd.xlane.f32.xlu0 %v705
      %v723 = vpop.xlane.xlu0 %722
      %724 = vadd.xlane.f32.xlu0 %v706
      %v725 = vpop.xlane.xlu0 %724
      %726 = vadd.xlane.f32.xlu0 %v707
      %v727 = vpop.xlane.xlu0 %726
      %728 = vadd.xlane.f32.xlu0 %v708
      %v729 = vpop.xlane.xlu0 %728
      %730 = vadd.xlane.f32.xlu0 %v709
      %v731 = vpop.xlane.xlu0 %730
      %732 = vadd.xlane.f32.xlu0 %v710
      %v733 = vpop.xlane.xlu0 %732
      %734 = vadd.xlane.f32.xlu0 %v711
      %v735 = vpop.xlane.xlu0 %734
      %736 = vadd.xlane.f32.xlu0 %v712
      %v737 = vpop.xlane.xlu0 %736
      %738 = vadd.xlane.f32.xlu0 %v713
      %v739 = vpop.xlane.xlu0 %738
      %740 = vadd.xlane.f32.xlu0 %v714
      %v741 = vpop.xlane.xlu0 %740
      %742 = vadd.xlane.f32.xlu0 %v715
      %v743 = vpop.xlane.xlu0 %742
      %744 = vadd.xlane.f32.xlu0 %v716
      %v745 = vpop.xlane.xlu0 %744
      %746 = vadd.xlane.f32.xlu0 %v717
      %v747 = vpop.xlane.xlu0 %746
      %748 = vadd.xlane.f32.xlu0 %v718
      %v749 = vpop.xlane.xlu0 %748
      %750 = vadd.xlane.f32.xlu0 %v719
      %v751 = vpop.xlane.xlu0 %750
      %v752 = vadd.f32 %v486, %v721
      %v753 = vadd.f32 %v487, %v723
      %v754 = vadd.f32 %v488, %v725
      %v755 = vadd.f32 %v489, %v727
      %v756 = vadd.f32 %v490, %v729
      %v757 = vadd.f32 %v491, %v731
      %v758 = vadd.f32 %v492, %v733
      %v759 = vadd.f32 %v493, %v735
      %v760 = vadd.f32 %v494, %v737
      %v761 = vadd.f32 %v495, %v739
      %v762 = vadd.f32 %v496, %v741
      %v763 = vadd.f32 %v497, %v743
      %v764 = vadd.f32 %v498, %v745
      %v765 = vadd.f32 %v499, %v747
      %v766 = vadd.f32 %v500, %v749
      %v767 = vadd.f32 %v501, %v751
      %768 = vst [vmem:[#allocation4] sm:$0xff] %v752
      %769 = vst [vmem:[#allocation4 + $0x8] sm:$0xff] %v753
      %770 = vst [vmem:[#allocation4 + $0x10] sm:$0xff] %v754
      %771 = vst [vmem:[#allocation4 + $0x18] sm:$0xff] %v755
      %772 = vst [vmem:[#allocation4 + $0x20] sm:$0xff] %v756
      %773 = vst [vmem:[#allocation4 + $0x28] sm:$0xff] %v757
      %774 = vst [vmem:[#allocation4 + $0x30] sm:$0xff] %v758
      %775 = vst [vmem:[#allocation4 + $0x38] sm:$0xff] %v759
      %776 = vst [vmem:[#allocation4 + $0x40] sm:$0xff] %v760
      %777 = vst [vmem:[#allocation4 + $0x48] sm:$0xff] %v761
      %778 = vst [vmem:[#allocation4 + $0x50] sm:$0xff] %v762
      %779 = vst [vmem:[#allocation4 + $0x58] sm:$0xff] %v763
      %780 = vst [vmem:[#allocation4 + $0x60] sm:$0xff] %v764
      %781 = vst [vmem:[#allocation4 + $0x68] sm:$0xff] %v765
      %782 = vst [vmem:[#allocation4 + $0x70] sm:$0xff] %v766
      %783 = vst [vmem:[#allocation4 + $0x78] sm:$0xff] %v767
      %v784 = vsel %vm688, %v603, 0.0
      %v785 = vsel %vm689, %v604, 0.0
      %v786 = vsel %vm690, %v605, 0.0
      %v787 = vsel %vm691, %v606, 0.0
      %v788 = vsel %vm692, %v607, 0.0
      %v789 = vsel %vm693, %v608, 0.0
      %v790 = vsel %vm694, %v609, 0.0
      %v791 = vsel %vm695, %v610, 0.0
      %v792 = vsel %vm696, %v611, 0.0
      %v793 = vsel %vm697, %v612, 0.0
      %v794 = vsel %vm698, %v613, 0.0
      %v795 = vsel %vm699, %v614, 0.0
      %v796 = vsel %vm700, %v615, 0.0
      %v797 = vsel %vm701, %v616, 0.0
      %v798 = vsel %vm702, %v617, 0.0
      %v799 = vsel %vm703, %v618, 0.0
      %800 = vadd.xlane.f32.xlu0 %v784
      %v801 = vpop.xlane.xlu0 %800
      %802 = vadd.xlane.f32.xlu0 %v785
      %v803 = vpop.xlane.xlu0 %802
      %804 = vadd.xlane.f32.xlu0 %v786
      %v805 = vpop.xlane.xlu0 %804
      %806 = vadd.xlane.f32.xlu0 %v787
      %v807 = vpop.xlane.xlu0 %806
      %808 = vadd.xlane.f32.xlu0 %v788
      %v809 = vpop.xlane.xlu0 %808
      %810 = vadd.xlane.f32.xlu0 %v789
      %v811 = vpop.xlane.xlu0 %810
      %812 = vadd.xlane.f32.xlu0 %v790
      %v813 = vpop.xlane.xlu0 %812
      %814 = vadd.xlane.f32.xlu0 %v791
      %v815 = vpop.xlane.xlu0 %814
      %816 = vadd.xlane.f32.xlu0 %v792
      %v817 = vpop.xlane.xlu0 %816
      %818 = vadd.xlane.f32.xlu0 %v793
      %v819 = vpop.xlane.xlu0 %818
      %820 = vadd.xlane.f32.xlu0 %v794
      %v821 = vpop.xlane.xlu0 %820
      %822 = vadd.xlane.f32.xlu0 %v795
      %v823 = vpop.xlane.xlu0 %822
      %824 = vadd.xlane.f32.xlu0 %v796
      %v825 = vpop.xlane.xlu0 %824
      %826 = vadd.xlane.f32.xlu0 %v797
      %v827 = vpop.xlane.xlu0 %826
      %828 = vadd.xlane.f32.xlu0 %v798
      %v829 = vpop.xlane.xlu0 %828
      %830 = vadd.xlane.f32.xlu0 %v799
      %v831 = vpop.xlane.xlu0 %830
      %v832 = vadd.f32 %v502, %v801
      %v833 = vadd.f32 %v503, %v803
      %v834 = vadd.f32 %v504, %v805
      %v835 = vadd.f32 %v505, %v807
      %v836 = vadd.f32 %v506, %v809
      %v837 = vadd.f32 %v507, %v811
      %v838 = vadd.f32 %v508, %v813
      %v839 = vadd.f32 %v509, %v815
      %v840 = vadd.f32 %v510, %v817
      %v841 = vadd.f32 %v511, %v819
      %v842 = vadd.f32 %v512, %v821
      %v843 = vadd.f32 %v513, %v823
      %v844 = vadd.f32 %v514, %v825
      %v845 = vadd.f32 %v515, %v827
      %v846 = vadd.f32 %v516, %v829
      %v847 = vadd.f32 %v517, %v831
      %848 = vst [vmem:[#allocation5] sm:$0xff] %v832
      %849 = vst [vmem:[#allocation5 + $0x8] sm:$0xff] %v833
      %850 = vst [vmem:[#allocation5 + $0x10] sm:$0xff] %v834
      %851 = vst [vmem:[#allocation5 + $0x18] sm:$0xff] %v835
      %852 = vst [vmem:[#allocation5 + $0x20] sm:$0xff] %v836
      %853 = vst [vmem:[#allocation5 + $0x28] sm:$0xff] %v837
      %854 = vst [vmem:[#allocation5 + $0x30] sm:$0xff] %v838
      %855 = vst [vmem:[#allocation5 + $0x38] sm:$0xff] %v839
      %856 = vst [vmem:[#allocation5 + $0x40] sm:$0xff] %v840
      %857 = vst [vmem:[#allocation5 + $0x48] sm:$0xff] %v841
      %858 = vst [vmem:[#allocation5 + $0x50] sm:$0xff] %v842
      %859 = vst [vmem:[#allocation5 + $0x58] sm:$0xff] %v843
      %860 = vst [vmem:[#allocation5 + $0x60] sm:$0xff] %v844
      %861 = vst [vmem:[#allocation5 + $0x68] sm:$0xff] %v845
      %862 = vst [vmem:[#allocation5 + $0x70] sm:$0xff] %v846
      %863 = vst [vmem:[#allocation5 + $0x78] sm:$0xff] %v847
    $region29: #{tpu_custom_call.1} parent=1 // pred_fallthru
      _
    %p864 = pneg %p629
    // Predicated region
    $region30: #{tpu_custom_call.1} parent=1 // pred_check
      _
    $region31: #{tpu_custom_call.1} parent=1 // pred_check_branch
      %866 = sbr.rel (%p629) target = $region33
    $region32: #{tpu_custom_call.1} parent=1 // pred_region
      %867 = vadd.xlane.f32.xlu0 %v439
      %v868 = vpop.xlane.xlu0 %867
      %869 = vadd.xlane.f32.xlu0 %v441
      %v870 = vpop.xlane.xlu0 %869
      %871 = vadd.xlane.f32.xlu0 %v443
      %v872 = vpop.xlane.xlu0 %871
      %873 = vadd.xlane.f32.xlu0 %v445
      %v874 = vpop.xlane.xlu0 %873
      %875 = vadd.xlane.f32.xlu0 %v447
      %v876 = vpop.xlane.xlu0 %875
      %877 = vadd.xlane.f32.xlu0 %v449
      %v878 = vpop.xlane.xlu0 %877
      %879 = vadd.xlane.f32.xlu0 %v451
      %v880 = vpop.xlane.xlu0 %879
      %881 = vadd.xlane.f32.xlu0 %v453
      %v882 = vpop.xlane.xlu0 %881
      %883 = vadd.xlane.f32.xlu0 %v455
      %v884 = vpop.xlane.xlu0 %883
      %885 = vadd.xlane.f32.xlu0 %v457
      %v886 = vpop.xlane.xlu0 %885
      %887 = vadd.xlane.f32.xlu0 %v459
      %v888 = vpop.xlane.xlu0 %887
      %889 = vadd.xlane.f32.xlu0 %v461
      %v890 = vpop.xlane.xlu0 %889
      %891 = vadd.xlane.f32.xlu0 %v463
      %v892 = vpop.xlane.xlu0 %891
      %893 = vadd.xlane.f32.xlu0 %v465
      %v894 = vpop.xlane.xlu0 %893
      %895 = vadd.xlane.f32.xlu0 %v467
      %v896 = vpop.xlane.xlu0 %895
      %897 = vadd.xlane.f32.xlu0 %v469
      %v898 = vpop.xlane.xlu0 %897
      %v899 = vadd.f32 %v486, %v868
      %v900 = vadd.f32 %v487, %v870
      %v901 = vadd.f32 %v488, %v872
      %v902 = vadd.f32 %v489, %v874
      %v903 = vadd.f32 %v490, %v876
      %v904 = vadd.f32 %v491, %v878
      %v905 = vadd.f32 %v492, %v880
      %v906 = vadd.f32 %v493, %v882
      %v907 = vadd.f32 %v494, %v884
      %v908 = vadd.f32 %v495, %v886
      %v909 = vadd.f32 %v496, %v888
      %v910 = vadd.f32 %v497, %v890
      %v911 = vadd.f32 %v498, %v892
      %v912 = vadd.f32 %v499, %v894
      %v913 = vadd.f32 %v500, %v896
      %v914 = vadd.f32 %v501, %v898
      %915 = vst [vmem:[#allocation4] sm:$0xff] %v899
      %916 = vst [vmem:[#allocation4 + $0x8] sm:$0xff] %v900
      %917 = vst [vmem:[#allocation4 + $0x10] sm:$0xff] %v901
      %918 = vst [vmem:[#allocation4 + $0x18] sm:$0xff] %v902
      %919 = vst [vmem:[#allocation4 + $0x20] sm:$0xff] %v903
      %920 = vst [vmem:[#allocation4 + $0x28] sm:$0xff] %v904
      %921 = vst [vmem:[#allocation4 + $0x30] sm:$0xff] %v905
      %922 = vst [vmem:[#allocation4 + $0x38] sm:$0xff] %v906
      %923 = vst [vmem:[#allocation4 + $0x40] sm:$0xff] %v907
      %924 = vst [vmem:[#allocation4 + $0x48] sm:$0xff] %v908
      %925 = vst [vmem:[#allocation4 + $0x50] sm:$0xff] %v909
      %926 = vst [vmem:[#allocation4 + $0x58] sm:$0xff] %v910
      %927 = vst [vmem:[#allocation4 + $0x60] sm:$0xff] %v911
      %928 = vst [vmem:[#allocation4 + $0x68] sm:$0xff] %v912
      %929 = vst [vmem:[#allocation4 + $0x70] sm:$0xff] %v913
      %930 = vst [vmem:[#allocation4 + $0x78] sm:$0xff] %v914
      %931 = vadd.xlane.f32.xlu0 %v603
      %v932 = vpop.xlane.xlu0 %931
      %933 = vadd.xlane.f32.xlu0 %v604
      %v934 = vpop.xlane.xlu0 %933
      %935 = vadd.xlane.f32.xlu0 %v605
      %v936 = vpop.xlane.xlu0 %935
      %937 = vadd.xlane.f32.xlu0 %v606
      %v938 = vpop.xlane.xlu0 %937
      %939 = vadd.xlane.f32.xlu0 %v607
      %v940 = vpop.xlane.xlu0 %939
      %941 = vadd.xlane.f32.xlu0 %v608
      %v942 = vpop.xlane.xlu0 %941
      %943 = vadd.xlane.f32.xlu0 %v609
      %v944 = vpop.xlane.xlu0 %943
      %945 = vadd.xlane.f32.xlu0 %v610
      %v946 = vpop.xlane.xlu0 %945
      %947 = vadd.xlane.f32.xlu0 %v611
      %v948 = vpop.xlane.xlu0 %947
      %949 = vadd.xlane.f32.xlu0 %v612
      %v950 = vpop.xlane.xlu0 %949
      %951 = vadd.xlane.f32.xlu0 %v613
      %v952 = vpop.xlane.xlu0 %951
      %953 = vadd.xlane.f32.xlu0 %v614
      %v954 = vpop.xlane.xlu0 %953
      %955 = vadd.xlane.f32.xlu0 %v615
      %v956 = vpop.xlane.xlu0 %955
      %957 = vadd.xlane.f32.xlu0 %v616
      %v958 = vpop.xlane.xlu0 %957
      %959 = vadd.xlane.f32.xlu0 %v617
      %v960 = vpop.xlane.xlu0 %959
      %961 = vadd.xlane.f32.xlu0 %v618
      %v962 = vpop.xlane.xlu0 %961
      %v963 = vadd.f32 %v502, %v932
      %v964 = vadd.f32 %v503, %v934
      %v965 = vadd.f32 %v504, %v936
      %v966 = vadd.f32 %v505, %v938
      %v967 = vadd.f32 %v506, %v940
      %v968 = vadd.f32 %v507, %v942
      %v969 = vadd.f32 %v508, %v944
      %v970 = vadd.f32 %v509, %v946
      %v971 = vadd.f32 %v510, %v948
      %v972 = vadd.f32 %v511, %v950
      %v973 = vadd.f32 %v512, %v952
      %v974 = vadd.f32 %v513, %v954
      %v975 = vadd.f32 %v514, %v956
      %v976 = vadd.f32 %v515, %v958
      %v977 = vadd.f32 %v516, %v960
      %v978 = vadd.f32 %v517, %v962
      %979 = vst [vmem:[#allocation5] sm:$0xff] %v963
      %980 = vst [vmem:[#allocation5 + $0x8] sm:$0xff] %v964
      %981 = vst [vmem:[#allocation5 + $0x10] sm:$0xff] %v965
      %982 = vst [vmem:[#allocation5 + $0x18] sm:$0xff] %v966
      %983 = vst [vmem:[#allocation5 + $0x20] sm:$0xff] %v967
      %984 = vst [vmem:[#allocation5 + $0x28] sm:$0xff] %v968
      %985 = vst [vmem:[#allocation5 + $0x30] sm:$0xff] %v969
      %986 = vst [vmem:[#allocation5 + $0x38] sm:$0xff] %v970
      %987 = vst [vmem:[#allocation5 + $0x40] sm:$0xff] %v971
      %988 = vst [vmem:[#allocation5 + $0x48] sm:$0xff] %v972
      %989 = vst [vmem:[#allocation5 + $0x50] sm:$0xff] %v973
      %990 = vst [vmem:[#allocation5 + $0x58] sm:$0xff] %v974
      %991 = vst [vmem:[#allocation5 + $0x60] sm:$0xff] %v975
      %992 = vst [vmem:[#allocation5 + $0x68] sm:$0xff] %v976
      %993 = vst [vmem:[#allocation5 + $0x70] sm:$0xff] %v977
      %994 = vst [vmem:[#allocation5 + $0x78] sm:$0xff] %v978
    $region33: #{tpu_custom_call.1} parent=1 // pred_fallthru
      _
    %995 = vst [vmem:[#allocation3] sm:$0xff] %v358
    %996 = vst [vmem:[#allocation3 + $0x8] sm:$0xff] %v359
    %997 = vst [vmem:[#allocation3 + $0x10] sm:$0xff] %v360
    %998 = vst [vmem:[#allocation3 + $0x18] sm:$0xff] %v361
    %999 = vst [vmem:[#allocation3 + $0x20] sm:$0xff] %v362
    %1000 = vst [vmem:[#allocation3 + $0x28] sm:$0xff] %v363
    %1001 = vst [vmem:[#allocation3 + $0x30] sm:$0xff] %v364
    %1002 = vst [vmem:[#allocation3 + $0x38] sm:$0xff] %v365
    %1003 = vst [vmem:[#allocation3 + $0x40] sm:$0xff] %v366
    %1004 = vst [vmem:[#allocation3 + $0x48] sm:$0xff] %v367
    %1005 = vst [vmem:[#allocation3 + $0x50] sm:$0xff] %v368
    %1006 = vst [vmem:[#allocation3 + $0x58] sm:$0xff] %v369
    %1007 = vst [vmem:[#allocation3 + $0x60] sm:$0xff] %v370
    %1008 = vst [vmem:[#allocation3 + $0x68] sm:$0xff] %v371
    %1009 = vst [vmem:[#allocation3 + $0x70] sm:$0xff] %v372
    %1010 = vst [vmem:[#allocation3 + $0x78] sm:$0xff] %v373
    // Predicated region
    $region34: #{tpu_custom_call.1} parent=1 // pred_check
      %p1011 = pneg %p33
    $region35: #{tpu_custom_call.1} parent=1 // pred_check_branch
      %1013 = sbr.rel (%p1011) target = $region37
    $region36: #{tpu_custom_call.1} parent=1 // pred_region
      %v1014 = vld [vmem:[#allocation4] sm:$0xff]
      %v1015 = vld [vmem:[#allocation4 + $0x8] sm:$0xff]
      %v1016 = vld [vmem:[#allocation4 + $0x10] sm:$0xff]
      %v1017 = vld [vmem:[#allocation4 + $0x18] sm:$0xff]
      %v1018 = vld [vmem:[#allocation4 + $0x20] sm:$0xff]
      %v1019 = vld [vmem:[#allocation4 + $0x28] sm:$0xff]
      %v1020 = vld [vmem:[#allocation4 + $0x30] sm:$0xff]
      %v1021 = vld [vmem:[#allocation4 + $0x38] sm:$0xff]
      %v1022 = vld [vmem:[#allocation4 + $0x40] sm:$0xff]
      %v1023 = vld [vmem:[#allocation4 + $0x48] sm:$0xff]
      %v1024 = vld [vmem:[#allocation4 + $0x50] sm:$0xff]
      %v1025 = vld [vmem:[#allocation4 + $0x58] sm:$0xff]
      %v1026 = vld [vmem:[#allocation4 + $0x60] sm:$0xff]
      %v1027 = vld [vmem:[#allocation4 + $0x68] sm:$0xff]
      %v1028 = vld [vmem:[#allocation4 + $0x70] sm:$0xff]
      %v1029 = vld [vmem:[#allocation4 + $0x78] sm:$0xff]
      %v1030 = vlog2.pop %v1014
      %v1031 = vmul.f32 %v1030, 0.6931472
      %v1032 = vlog2.pop %v1015
      %v1033 = vmul.f32 %v1032, 0.6931472
      %v1034 = vlog2.pop %v1016
      %v1035 = vmul.f32 %v1034, 0.6931472
      %v1036 = vlog2.pop %v1017
      %v1037 = vmul.f32 %v1036, 0.6931472
      %v1038 = vlog2.pop %v1018
      %v1039 = vmul.f32 %v1038, 0.6931472
      %v1040 = vlog2.pop %v1019
      %v1041 = vmul.f32 %v1040, 0.6931472
      %v1042 = vlog2.pop %v1020
      %v1043 = vmul.f32 %v1042, 0.6931472
      %v1044 = vlog2.pop %v1021
      %v1045 = vmul.f32 %v1044, 0.6931472
      %v1046 = vlog2.pop %v1022
      %v1047 = vmul.f32 %v1046, 0.6931472
      %v1048 = vlog2.pop %v1023
      %v1049 = vmul.f32 %v1048, 0.6931472
      %v1050 = vlog2.pop %v1024
      %v1051 = vmul.f32 %v1050, 0.6931472
      %v1052 = vlog2.pop %v1025
      %v1053 = vmul.f32 %v1052, 0.6931472
      %v1054 = vlog2.pop %v1026
      %v1055 = vmul.f32 %v1054, 0.6931472
      %v1056 = vlog2.pop %v1027
      %v1057 = vmul.f32 %v1056, 0.6931472
      %v1058 = vlog2.pop %v1028
      %v1059 = vmul.f32 %v1058, 0.6931472
      %v1060 = vlog2.pop %v1029
      %v1061 = vmul.f32 %v1060, 0.6931472
      %v1062 = vadd.f32 %v358, %v1031
      %v1063 = vadd.f32 %v359, %v1033
      %v1064 = vadd.f32 %v360, %v1035
      %v1065 = vadd.f32 %v361, %v1037
      %v1066 = vadd.f32 %v362, %v1039
      %v1067 = vadd.f32 %v363, %v1041
      %v1068 = vadd.f32 %v364, %v1043
      %v1069 = vadd.f32 %v365, %v1045
      %v1070 = vadd.f32 %v366, %v1047
      %v1071 = vadd.f32 %v367, %v1049
      %v1072 = vadd.f32 %v368, %v1051
      %v1073 = vadd.f32 %v369, %v1053
      %v1074 = vadd.f32 %v370, %v1055
      %v1075 = vadd.f32 %v371, %v1057
      %v1076 = vadd.f32 %v372, %v1059
      %v1077 = vadd.f32 %v373, %v1061
      %vm1078 = vcmask 7168
      %1079 = vst.msk [vmem:[%s4] sm:$0xff] %vm1078, %v1062
      %1080 = vst.msk [vmem:[%s4 + $0x8] sm:$0xff] %vm1078, %v1063
      %1081 = vst.msk [vmem:[%s4 + $0x10] sm:$0xff] %vm1078, %v1064
      %1082 = vst.msk [vmem:[%s4 + $0x18] sm:$0xff] %vm1078, %v1065
      %1083 = vst.msk [vmem:[%s4 + $0x20] sm:$0xff] %vm1078, %v1066
      %1084 = vst.msk [vmem:[%s4 + $0x28] sm:$0xff] %vm1078, %v1067
      %1085 = vst.msk [vmem:[%s4 + $0x30] sm:$0xff] %vm1078, %v1068
      %1086 = vst.msk [vmem:[%s4 + $0x38] sm:$0xff] %vm1078, %v1069
      %1087 = vst.msk [vmem:[%s4 + $0x40] sm:$0xff] %vm1078, %v1070
      %1088 = vst.msk [vmem:[%s4 + $0x48] sm:$0xff] %vm1078, %v1071
      %1089 = vst.msk [vmem:[%s4 + $0x50] sm:$0xff] %vm1078, %v1072
      %1090 = vst.msk [vmem:[%s4 + $0x58] sm:$0xff] %vm1078, %v1073
      %1091 = vst.msk [vmem:[%s4 + $0x60] sm:$0xff] %vm1078, %v1074
      %1092 = vst.msk [vmem:[%s4 + $0x68] sm:$0xff] %vm1078, %v1075
      %1093 = vst.msk [vmem:[%s4 + $0x70] sm:$0xff] %vm1078, %v1076
      %1094 = vst.msk [vmem:[%s4 + $0x78] sm:$0xff] %vm1078, %v1077
      %v1095 = vld [vmem:[#allocation5] sm:$0xff]
      %v1096 = vld [vmem:[#allocation5 + $0x8] sm:$0xff]
      %v1097 = vld [vmem:[#allocation5 + $0x10] sm:$0xff]
      %v1098 = vld [vmem:[#allocation5 + $0x18] sm:$0xff]
      %v1099 = vld [vmem:[#allocation5 + $0x20] sm:$0xff]
      %v1100 = vld [vmem:[#allocation5 + $0x28] sm:$0xff]
      %v1101 = vld [vmem:[#allocation5 + $0x30] sm:$0xff]
      %v1102 = vld [vmem:[#allocation5 + $0x38] sm:$0xff]
      %v1103 = vld [vmem:[#allocation5 + $0x40] sm:$0xff]
      %v1104 = vld [vmem:[#allocation5 + $0x48] sm:$0xff]
      %v1105 = vld [vmem:[#allocation5 + $0x50] sm:$0xff]
      %v1106 = vld [vmem:[#allocation5 + $0x58] sm:$0xff]
      %v1107 = vld [vmem:[#allocation5 + $0x60] sm:$0xff]
      %v1108 = vld [vmem:[#allocation5 + $0x68] sm:$0xff]
      %v1109 = vld [vmem:[#allocation5 + $0x70] sm:$0xff]
      %v1110 = vld [vmem:[#allocation5 + $0x78] sm:$0xff]
      %1111 = vst.msk [vmem:[%s5] sm:$0xff] %vm1078, %v1095
      %1112 = vst.msk [vmem:[%s5 + $0x8] sm:$0xff] %vm1078, %v1096
      %1113 = vst.msk [vmem:[%s5 + $0x10] sm:$0xff] %vm1078, %v1097
      %1114 = vst.msk [vmem:[%s5 + $0x18] sm:$0xff] %vm1078, %v1098
      %1115 = vst.msk [vmem:[%s5 + $0x20] sm:$0xff] %vm1078, %v1099
      %1116 = vst.msk [vmem:[%s5 + $0x28] sm:$0xff] %vm1078, %v1100
      %1117 = vst.msk [vmem:[%s5 + $0x30] sm:$0xff] %vm1078, %v1101
      %1118 = vst.msk [vmem:[%s5 + $0x38] sm:$0xff] %vm1078, %v1102
      %1119 = vst.msk [vmem:[%s5 + $0x40] sm:$0xff] %vm1078, %v1103
      %1120 = vst.msk [vmem:[%s5 + $0x48] sm:$0xff] %vm1078, %v1104
      %1121 = vst.msk [vmem:[%s5 + $0x50] sm:$0xff] %vm1078, %v1105
      %1122 = vst.msk [vmem:[%s5 + $0x58] sm:$0xff] %vm1078, %v1106
      %1123 = vst.msk [vmem:[%s5 + $0x60] sm:$0xff] %vm1078, %v1107
      %1124 = vst.msk [vmem:[%s5 + $0x68] sm:$0xff] %vm1078, %v1108
      %1125 = vst.msk [vmem:[%s5 + $0x70] sm:$0xff] %vm1078, %v1109
      %1126 = vst.msk [vmem:[%s5 + $0x78] sm:$0xff] %vm1078, %v1110
    $region37: #{tpu_custom_call.1} parent=1 // pred_fallthru
      _
    // Predicated region
    $region38: #{tpu_custom_call.1} parent=1 // pred_check
      _
    $region39: #{tpu_custom_call.1} parent=1 // pred_check_branch
      %1128 = sbr.rel (0) target = $region41
    $region40: #{tpu_custom_call.1} parent=1 // pred_region
      _
    $region41: #{tpu_custom_call.1} parent=1 // pred_fallthru
      _
    // Predicated region
    $region42: #{tpu_custom_call.1} parent=1 // pred_check
      _
    $region43: #{tpu_custom_call.1} parent=1 // pred_check_branch
      %1130 = sbr.rel (0) target = $region45
    $region44: #{tpu_custom_call.1} parent=1 // pred_region
      _
    $region45: #{tpu_custom_call.1} parent=1 // pred_fallthru
      _
    // Predicated region
    $region46: #{tpu_custom_call.1} parent=1 // pred_check
      _
    $region47: #{tpu_custom_call.1} parent=1 // pred_check_branch
      %1132 = sbr.rel (0) target = $region49
    $region48: #{tpu_custom_call.1} parent=1 // pred_region
      _
    $region49: #{tpu_custom_call.1} parent=1 // pred_fallthru
      _
    // Predicated region
    $region50: #{tpu_custom_call.1} parent=1 // pred_check
      _
    $region51: #{tpu_custom_call.1} parent=1 // pred_check_branch
      %1134 = sbr.rel (0) target = $region53
    $region52: #{tpu_custom_call.1} parent=1 // pred_region
      _
    $region53: #{tpu_custom_call.1} parent=1 // pred_fallthru
      _
    %1135 = vsyncpa [#allocation7], 1

</llo_original>
